<compile_context>
chip_gen: v5e
topology: v5e:2x2
jax: 0.10.0
libtpu: 0.0.40
codegen_flags: <defaults>
</compile_context>

<pallas_src>
import functools

import jax
import jax.numpy as jnp
from jax.experimental import pallas as pl
from jax.experimental.pallas import tpu as pltpu

LANE = 128  # pad feature dims to the 128-lane vreg width


# -----------------------------------------------------------------------------
# Pallas kernel: whole GCN forward, all layers fused
# -----------------------------------------------------------------------------
def _gcn_fused_kernel(feat_ref, adj_ref, invdeg_ref,
                      wn_ref, bn_ref, wls_ref, wln_ref, bl_ref,
                      out_ref, *, n_layers):
    """feat_ref   [N, P]    f32   node features, zero-padded to P=128 channels
       adj_ref    [N, N]    bf16  edge-count adjacency A[dst, src] (exact small ints)
       invdeg_ref [N, 1]    f32   1 / max(in_degree, 1)
       wn_ref     [L, P, P] bf16  neigh_linear weight^T (zero padded)
       bn_ref     [L, 1, P] f32   neigh_linear bias
       wls_ref    [L, P, P] bf16  linear weight^T, self half
       wln_ref    [L, P, P] bf16  linear weight^T, neigh half
       bl_ref     [L, 1, P] f32   linear bias
       out_ref    [N, P]    f32
    """
    feat = feat_ref[...]            # f32, stays live in VMEM/vregs across layers
    adj = adj_ref[...]              # bf16
    inv_deg = invdeg_ref[...]       # f32

    for l in range(n_layers):       # static unroll over layers
        feat_bf = feat.astype(jnp.bfloat16)
        # h = neigh_linear(features)
        h = jnp.dot(feat_bf, wn_ref[l],
                    preferred_element_type=jnp.float32) + bn_ref[l]
        # scatter-mean with out=features.clone():
        #   s[i] = (features[i] + sum_{e: dst(e)=i} h[src(e)]) / max(deg_in(i), 1)
        agg = jnp.dot(adj, h.astype(jnp.bfloat16),
                      preferred_element_type=jnp.float32)
        s = (feat + agg) * inv_deg
        # linear(cat([features, s], -1)) == feat @ W_self + s @ W_neigh + b
        z = (jnp.dot(feat_bf, wls_ref[l], preferred_element_type=jnp.float32)
             + jnp.dot(s.astype(jnp.bfloat16), wln_ref[l],
                       preferred_element_type=jnp.float32)
             + bl_ref[l])
        if l < n_layers - 1:
            z = jnp.maximum(z, 0.0)                                   # F.relu
            sumsq = jnp.sum(z * z, axis=-1, keepdims=True)
            # F.normalize(dim=1, eps=1e-12): z / max(||z||, 1e-12)
            z = z * jax.lax.rsqrt(jnp.maximum(sumsq, 1e-24))
            # nn.Dropout(p=0.5) -> identity in eval mode
        feat = z
    out_ref[...] = feat


# -----------------------------------------------------------------------------
# Wrapper: build adjacency / padded operands, single pallas_call
# -----------------------------------------------------------------------------
def gcn_forward(x, edge_index, layer_params):
    N, in_feats = x.shape
    out_feats = layer_params[-1]["wl_self"].shape[1]
    n_layers = len(layer_params)
    P = LANE
    Np = ((N + 7) // 8) * 8                      # pad node count to sublane multiple

    dst, src = edge_index[0], edge_index[1]
    adj = jnp.zeros((Np, Np), jnp.float32).at[dst, src].add(1.0)   # A[dst, src]
    deg = jnp.sum(adj, axis=1, keepdims=True)
    inv_deg = 1.0 / jnp.maximum(deg, 1.0)        # reciprocal computed once, outside kernel
    adj_bf = adj.astype(jnp.bfloat16)            # small integer counts -> exact in bf16

    feat = jnp.zeros((Np, P), jnp.float32).at[:N, :in_feats].set(x)

    def pad2(a):      # [f_in, f_out] -> [P, P] (zero pad)
        return jnp.pad(a, ((0, P - a.shape[0]), (0, P - a.shape[1])))

    def padb(b):      # [1, f] -> [1, P]
        return jnp.pad(b, ((0, 0), (0, P - b.shape[1])))

    wn_all = jnp.stack([pad2(p["wn"]) for p in layer_params]).astype(jnp.bfloat16)
    bn_all = jnp.stack([padb(p["bn"]) for p in layer_params])
    wls_all = jnp.stack([pad2(p["wl_self"]) for p in layer_params]).astype(jnp.bfloat16)
    wln_all = jnp.stack([pad2(p["wl_neigh"]) for p in layer_params]).astype(jnp.bfloat16)
    bl_all = jnp.stack([padb(p["bl"]) for p in layer_params])

    def full(shape):
        return pl.BlockSpec(shape, lambda i, s=shape: (0,) * len(s))

    kernel = functools.partial(_gcn_fused_kernel, n_layers=n_layers)
    out = pl.pallas_call(
        kernel,
        out_shape=jax.ShapeDtypeStruct((Np, P), jnp.float32),
        grid=(1,),
        in_specs=[
            full((Np, P)),            # features (padded)
            full((Np, Np)),           # adjacency, bf16
            full((Np, 1)),            # 1 / clamped in-degree
            full((n_layers, P, P)),   # neigh_linear W^T (all layers)
            full((n_layers, 1, P)),   # neigh_linear bias
            full((n_layers, P, P)),   # linear W^T, self half
            full((n_layers, P, P)),   # linear W^T, neigh half
            full((n_layers, 1, P)),   # linear bias
        ],
        out_specs=full((Np, P)),
        compiler_params=pltpu.CompilerParams(
            dimension_semantics=("arbitrary",)),
    )(feat, adj_bf, inv_deg, wn_all, bn_all, wls_all, wln_all, bl_all)
    return out[:N, :out_feats]


# -----------------------------------------------------------------------------
# Parameter init (deterministic, mirrors SageConvScatter.reset_parameters)
# -----------------------------------------------------------------------------
def _xavier_uniform(key, out_f, in_f, gain):
    bound = gain * (6.0 / (in_f + out_f)) ** 0.5
    # torch Linear weight is [out, in]; return transposed [in, out] for x @ W.
    w = jax.random.uniform(key, (out_f, in_f), jnp.float32, -bound, bound)
    return w.T


def make_sage_params(key, in_f, out_f):
    gain = 2.0 ** 0.5  # nn.init.calculate_gain('relu')
    k1, k2 = jax.random.split(key)
    wn = _xavier_uniform(k1, in_f, in_f, gain)            # [in, in]
    wl = _xavier_uniform(k2, out_f, 2 * in_f, gain)       # [2*in, out]
    return {
        "wn": wn,
        "bn": jnp.zeros((1, in_f), jnp.float32),
        "wl_self": wl[:in_f],                              # multiplies `features`
        "wl_neigh": wl[in_f:],                             # multiplies `s`
        "bl": jnp.zeros((1, out_f), jnp.float32),
    }


# -----------------------------------------------------------------------------
# Pure-JAX (f32) reference for verification
# -----------------------------------------------------------------------------
def gcn_reference(x, edge_index, layer_params):
    N = x.shape[0]
    dst, src = edge_index[0], edge_index[1]
    adj = jnp.zeros((N, N), jnp.float32).at[dst, src].add(1.0)
    deg = jnp.maximum(jnp.sum(adj, axis=1, keepdims=True), 1.0)

    def layer(feat, p, act_norm):
        h = feat @ p["wn"] + p["bn"]
        s = (feat + adj @ h) / deg
        z = feat @ p["wl_self"] + s @ p["wl_neigh"] + p["bl"]
        if act_norm:
            z = jnp.maximum(z, 0.0)
            z = z / jnp.maximum(jnp.linalg.norm(z, axis=-1, keepdims=True), 1e-12)
        return z

    h = x
    for p in layer_params[:-1]:
        h = layer(h, p, True)
    return layer(h, layer_params[-1], False)


if __name__ == "__main__":
    key = jax.random.PRNGKey(0)
    N, E = 64, 256
    in_feats, n_hidden, out_feats, n_layers = 16, 32, 8, 2

    k_x, k_e, k_p = jax.random.split(key, 3)
    x = jax.random.normal(k_x, (N, in_feats), jnp.float32)
    edge_index = jax.random.randint(k_e, (2, E), 0, N, jnp.int32)

    # layer sizes: [in->hidden] + (n_layers-1)*[hidden->hidden] + [hidden->out]
    dims = [(in_feats, n_hidden)] + [(n_hidden, n_hidden)] * (n_layers - 1) + \
           [(n_hidden, out_feats)]
    pkeys = jax.random.split(k_p, len(dims))
    layer_params = [make_sage_params(k, fi, fo) for k, (fi, fo) in zip(pkeys, dims)]

    out = gcn_forward(x, edge_index, layer_params)
    out = jax.block_until_ready(out)

    ref = gcn_reference(x, edge_index, layer_params)
    assert out.shape == (N, out_feats)
    # bf16 MXU operands -> compare with a relative-Frobenius-error tolerance.
    rel_err = jnp.linalg.norm(out - ref) / jnp.maximum(jnp.linalg.norm(ref), 1e-12)
    assert float(rel_err) < 5e-2, f"mismatch vs reference (rel err {float(rel_err):.3e})"

    print("KERNEL_OK")
</pallas_src>

<mosaic_0001>
module attributes {stable_mosaic.version = 11 : i64} {
  func.func @_gcn_fused_kernel(%arg0: i32, %arg1: memref<64x128xf32, #tpu.memory_space<vmem>>, %arg2: memref<64x64xbf16, #tpu.memory_space<vmem>>, %arg3: memref<64x1xf32, #tpu.memory_space<vmem>>, %arg4: memref<3x128x128xbf16, #tpu.memory_space<vmem>>, %arg5: memref<3x1x128xf32, #tpu.memory_space<vmem>>, %arg6: memref<3x128x128xbf16, #tpu.memory_space<vmem>>, %arg7: memref<3x128x128xbf16, #tpu.memory_space<vmem>>, %arg8: memref<3x1x128xf32, #tpu.memory_space<vmem>>, %arg9: memref<64x128xf32, #tpu.memory_space<vmem>>) attributes {dimension_semantics = [#tpu.dimension_semantics<arbitrary>], iteration_bounds = array<i64: 1>, scalar_prefetch = 0 : i64, scratch_operands = 0 : i64, tpu.core_type = #tpu.core_type<tc>, window_params = [{pipeline_mode = #tpu.pipeline_mode<synchronous>, transform_indices = @transform_0, window_bounds = array<i64: 64, 128>}, {pipeline_mode = #tpu.pipeline_mode<synchronous>, transform_indices = @transform_1, window_bounds = array<i64: 64, 64>}, {pipeline_mode = #tpu.pipeline_mode<synchronous>, transform_indices = @transform_2, window_bounds = array<i64: 64, 1>}, {pipeline_mode = #tpu.pipeline_mode<synchronous>, transform_indices = @transform_3, window_bounds = array<i64: 3, 128, 128>}, {pipeline_mode = #tpu.pipeline_mode<synchronous>, transform_indices = @transform_4, window_bounds = array<i64: 3, 1, 128>}, {pipeline_mode = #tpu.pipeline_mode<synchronous>, transform_indices = @transform_5, window_bounds = array<i64: 3, 128, 128>}, {pipeline_mode = #tpu.pipeline_mode<synchronous>, transform_indices = @transform_6, window_bounds = array<i64: 3, 128, 128>}, {pipeline_mode = #tpu.pipeline_mode<synchronous>, transform_indices = @transform_7, window_bounds = array<i64: 3, 1, 128>}, {pipeline_mode = #tpu.pipeline_mode<synchronous>, transform_indices = @transform_8, window_bounds = array<i64: 64, 128>}]} {
    %c0 = arith.constant 0 : index
    %c0_0 = arith.constant 0 : index
    %0 = vector.load %arg1[%c0, %c0_0] : memref<64x128xf32, #tpu.memory_space<vmem>>, vector<64x128xf32>
    %c0_1 = arith.constant 0 : index
    %c0_2 = arith.constant 0 : index
    %1 = vector.load %arg2[%c0_1, %c0_2] : memref<64x64xbf16, #tpu.memory_space<vmem>>, vector<64x64xbf16>
    %c0_3 = arith.constant 0 : index
    %c0_4 = arith.constant 0 : index
    %2 = vector.load %arg3[%c0_3, %c0_4] : memref<64x1xf32, #tpu.memory_space<vmem>>, vector<64x1xf32>
    %3 = arith.truncf %0 : vector<64x128xf32> to vector<64x128xbf16>
    %c0_5 = arith.constant 0 : index
    %c0_6 = arith.constant 0 : index
    %c0_7 = arith.constant 0 : index
    %4 = vector.load %arg4[%c0_5, %c0_6, %c0_7] : memref<3x128x128xbf16, #tpu.memory_space<vmem>>, vector<1x128x128xbf16>
    %5 = vector.shape_cast %4 : vector<1x128x128xbf16> to vector<128x128xbf16>
    %cst = arith.constant dense<0.000000e+00> : vector<64x128xf32>
    %6 = tpu.matmul %3, %5, %cst {dimension_numbers = #tpu.dot_dimension_numbers<[1], [0], [0], [1], [0, 0, 1, 1], [], []>} : vector<64x128xbf16>, vector<128x128xbf16>, vector<64x128xf32> -> vector<64x128xf32>
    %c0_8 = arith.constant 0 : index
    %c0_9 = arith.constant 0 : index
    %c0_10 = arith.constant 0 : index
    %7 = vector.load %arg5[%c0_8, %c0_9, %c0_10] : memref<3x1x128xf32, #tpu.memory_space<vmem>>, vector<1x1x128xf32>
    %8 = vector.shape_cast %7 : vector<1x1x128xf32> to vector<1x128xf32>
    %9 = vector.broadcast %8 : vector<1x128xf32> to vector<64x128xf32>
    %10 = arith.addf %6, %9 : vector<64x128xf32>
    %11 = arith.truncf %10 : vector<64x128xf32> to vector<64x128xbf16>
    %cst_11 = arith.constant dense<0.000000e+00> : vector<64x128xf32>
    %12 = tpu.matmul %1, %11, %cst_11 {dimension_numbers = #tpu.dot_dimension_numbers<[1], [0], [0], [1], [0, 0, 1, 1], [], []>} : vector<64x64xbf16>, vector<64x128xbf16>, vector<64x128xf32> -> vector<64x128xf32>
    %13 = arith.addf %0, %12 : vector<64x128xf32>
    %14 = vector.broadcast %2 : vector<64x1xf32> to vector<64x128xf32>
    %15 = arith.mulf %13, %14 : vector<64x128xf32>
    %c0_12 = arith.constant 0 : index
    %c0_13 = arith.constant 0 : index
    %c0_14 = arith.constant 0 : index
    %16 = vector.load %arg6[%c0_12, %c0_13, %c0_14] : memref<3x128x128xbf16, #tpu.memory_space<vmem>>, vector<1x128x128xbf16>
    %17 = vector.shape_cast %16 : vector<1x128x128xbf16> to vector<128x128xbf16>
    %cst_15 = arith.constant dense<0.000000e+00> : vector<64x128xf32>
    %18 = tpu.matmul %3, %17, %cst_15 {dimension_numbers = #tpu.dot_dimension_numbers<[1], [0], [0], [1], [0, 0, 1, 1], [], []>} : vector<64x128xbf16>, vector<128x128xbf16>, vector<64x128xf32> -> vector<64x128xf32>
    %19 = arith.truncf %15 : vector<64x128xf32> to vector<64x128xbf16>
    %c0_16 = arith.constant 0 : index
    %c0_17 = arith.constant 0 : index
    %c0_18 = arith.constant 0 : index
    %20 = vector.load %arg7[%c0_16, %c0_17, %c0_18] : memref<3x128x128xbf16, #tpu.memory_space<vmem>>, vector<1x128x128xbf16>
    %21 = vector.shape_cast %20 : vector<1x128x128xbf16> to vector<128x128xbf16>
    %cst_19 = arith.constant dense<0.000000e+00> : vector<64x128xf32>
    %22 = tpu.matmul %19, %21, %cst_19 {dimension_numbers = #tpu.dot_dimension_numbers<[1], [0], [0], [1], [0, 0, 1, 1], [], []>} : vector<64x128xbf16>, vector<128x128xbf16>, vector<64x128xf32> -> vector<64x128xf32>
    %23 = arith.addf %18, %22 : vector<64x128xf32>
    %c0_20 = arith.constant 0 : index
    %c0_21 = arith.constant 0 : index
    %c0_22 = arith.constant 0 : index
    %24 = vector.load %arg8[%c0_20, %c0_21, %c0_22] : memref<3x1x128xf32, #tpu.memory_space<vmem>>, vector<1x1x128xf32>
    %25 = vector.shape_cast %24 : vector<1x1x128xf32> to vector<1x128xf32>
    %26 = vector.broadcast %25 : vector<1x128xf32> to vector<64x128xf32>
    %27 = arith.addf %23, %26 : vector<64x128xf32>
    %cst_23 = arith.constant 0.000000e+00 : f32
    %28 = vector.broadcast %cst_23 : f32 to vector<64x128xf32>
    %29 = arith.maximumf %27, %28 : vector<64x128xf32>
    %30 = arith.mulf %29, %29 : vector<64x128xf32>
    %cst_24 = arith.constant dense<0.000000e+00> : vector<64xf32>
    %31 = vector.multi_reduction <add>, %30, %cst_24 [1] : vector<64x128xf32> to vector<64xf32>
    %32 = vector.shape_cast %31 : vector<64xf32> to vector<64x1xf32>
    %cst_25 = arith.constant 1.000000e-24 : f32
    %33 = vector.broadcast %cst_25 : f32 to vector<64x1xf32>
    %34 = arith.maximumf %32, %33 : vector<64x1xf32>
    %35 = math.rsqrt %34 : vector<64x1xf32>
    %36 = vector.broadcast %35 : vector<64x1xf32> to vector<64x128xf32>
    %37 = arith.mulf %29, %36 : vector<64x128xf32>
    %38 = arith.truncf %37 : vector<64x128xf32> to vector<64x128xbf16>
    %c1 = arith.constant 1 : index
    %c0_26 = arith.constant 0 : index
    %c0_27 = arith.constant 0 : index
    %39 = vector.load %arg4[%c1, %c0_26, %c0_27] : memref<3x128x128xbf16, #tpu.memory_space<vmem>>, vector<1x128x128xbf16>
    %40 = vector.shape_cast %39 : vector<1x128x128xbf16> to vector<128x128xbf16>
    %cst_28 = arith.constant dense<0.000000e+00> : vector<64x128xf32>
    %41 = tpu.matmul %38, %40, %cst_28 {dimension_numbers = #tpu.dot_dimension_numbers<[1], [0], [0], [1], [0, 0, 1, 1], [], []>} : vector<64x128xbf16>, vector<128x128xbf16>, vector<64x128xf32> -> vector<64x128xf32>
    %c1_29 = arith.constant 1 : index
    %c0_30 = arith.constant 0 : index
    %c0_31 = arith.constant 0 : index
    %42 = vector.load %arg5[%c1_29, %c0_30, %c0_31] : memref<3x1x128xf32, #tpu.memory_space<vmem>>, vector<1x1x128xf32>
    %43 = vector.shape_cast %42 : vector<1x1x128xf32> to vector<1x128xf32>
    %44 = vector.broadcast %43 : vector<1x128xf32> to vector<64x128xf32>
    %45 = arith.addf %41, %44 : vector<64x128xf32>
    %46 = arith.truncf %45 : vector<64x128xf32> to vector<64x128xbf16>
    %cst_32 = arith.constant dense<0.000000e+00> : vector<64x128xf32>
    %47 = tpu.matmul %1, %46, %cst_32 {dimension_numbers = #tpu.dot_dimension_numbers<[1], [0], [0], [1], [0, 0, 1, 1], [], []>} : vector<64x64xbf16>, vector<64x128xbf16>, vector<64x128xf32> -> vector<64x128xf32>
    %48 = arith.addf %37, %47 : vector<64x128xf32>
    %49 = vector.broadcast %2 : vector<64x1xf32> to vector<64x128xf32>
    %50 = arith.mulf %48, %49 : vector<64x128xf32>
    %c1_33 = arith.constant 1 : index
    %c0_34 = arith.constant 0 : index
    %c0_35 = arith.constant 0 : index
    %51 = vector.load %arg6[%c1_33, %c0_34, %c0_35] : memref<3x128x128xbf16, #tpu.memory_space<vmem>>, vector<1x128x128xbf16>
    %52 = vector.shape_cast %51 : vector<1x128x128xbf16> to vector<128x128xbf16>
    %cst_36 = arith.constant dense<0.000000e+00> : vector<64x128xf32>
    %53 = tpu.matmul %38, %52, %cst_36 {dimension_numbers = #tpu.dot_dimension_numbers<[1], [0], [0], [1], [0, 0, 1, 1], [], []>} : vector<64x128xbf16>, vector<128x128xbf16>, vector<64x128xf32> -> vector<64x128xf32>
    %54 = arith.truncf %50 : vector<64x128xf32> to vector<64x128xbf16>
    %c1_37 = arith.constant 1 : index
    %c0_38 = arith.constant 0 : index
    %c0_39 = arith.constant 0 : index
    %55 = vector.load %arg7[%c1_37, %c0_38, %c0_39] : memref<3x128x128xbf16, #tpu.memory_space<vmem>>, vector<1x128x128xbf16>
    %56 = vector.shape_cast %55 : vector<1x128x128xbf16> to vector<128x128xbf16>
    %cst_40 = arith.constant dense<0.000000e+00> : vector<64x128xf32>
    %57 = tpu.matmul %54, %56, %cst_40 {dimension_numbers = #tpu.dot_dimension_numbers<[1], [0], [0], [1], [0, 0, 1, 1], [], []>} : vector<64x128xbf16>, vector<128x128xbf16>, vector<64x128xf32> -> vector<64x128xf32>
    %58 = arith.addf %53, %57 : vector<64x128xf32>
    %c1_41 = arith.constant 1 : index
    %c0_42 = arith.constant 0 : index
    %c0_43 = arith.constant 0 : index
    %59 = vector.load %arg8[%c1_41, %c0_42, %c0_43] : memref<3x1x128xf32, #tpu.memory_space<vmem>>, vector<1x1x128xf32>
    %60 = vector.shape_cast %59 : vector<1x1x128xf32> to vector<1x128xf32>
    %61 = vector.broadcast %60 : vector<1x128xf32> to vector<64x128xf32>
    %62 = arith.addf %58, %61 : vector<64x128xf32>
    %cst_44 = arith.constant 0.000000e+00 : f32
    %63 = vector.broadcast %cst_44 : f32 to vector<64x128xf32>
    %64 = arith.maximumf %62, %63 : vector<64x128xf32>
    %65 = arith.mulf %64, %64 : vector<64x128xf32>
    %cst_45 = arith.constant dense<0.000000e+00> : vector<64xf32>
    %66 = vector.multi_reduction <add>, %65, %cst_45 [1] : vector<64x128xf32> to vector<64xf32>
    %67 = vector.shape_cast %66 : vector<64xf32> to vector<64x1xf32>
    %cst_46 = arith.constant 1.000000e-24 : f32
    %68 = vector.broadcast %cst_46 : f32 to vector<64x1xf32>
    %69 = arith.maximumf %67, %68 : vector<64x1xf32>
    %70 = math.rsqrt %69 : vector<64x1xf32>
    %71 = vector.broadcast %70 : vector<64x1xf32> to vector<64x128xf32>
    %72 = arith.mulf %64, %71 : vector<64x128xf32>
    %73 = arith.truncf %72 : vector<64x128xf32> to vector<64x128xbf16>
    %c2 = arith.constant 2 : index
    %c0_47 = arith.constant 0 : index
    %c0_48 = arith.constant 0 : index
    %74 = vector.load %arg4[%c2, %c0_47, %c0_48] : memref<3x128x128xbf16, #tpu.memory_space<vmem>>, vector<1x128x128xbf16>
    %75 = vector.shape_cast %74 : vector<1x128x128xbf16> to vector<128x128xbf16>
    %cst_49 = arith.constant dense<0.000000e+00> : vector<64x128xf32>
    %76 = tpu.matmul %73, %75, %cst_49 {dimension_numbers = #tpu.dot_dimension_numbers<[1], [0], [0], [1], [0, 0, 1, 1], [], []>} : vector<64x128xbf16>, vector<128x128xbf16>, vector<64x128xf32> -> vector<64x128xf32>
    %c2_50 = arith.constant 2 : index
    %c0_51 = arith.constant 0 : index
    %c0_52 = arith.constant 0 : index
    %77 = vector.load %arg5[%c2_50, %c0_51, %c0_52] : memref<3x1x128xf32, #tpu.memory_space<vmem>>, vector<1x1x128xf32>
    %78 = vector.shape_cast %77 : vector<1x1x128xf32> to vector<1x128xf32>
    %79 = vector.broadcast %78 : vector<1x128xf32> to vector<64x128xf32>
    %80 = arith.addf %76, %79 : vector<64x128xf32>
    %81 = arith.truncf %80 : vector<64x128xf32> to vector<64x128xbf16>
    %cst_53 = arith.constant dense<0.000000e+00> : vector<64x128xf32>
    %82 = tpu.matmul %1, %81, %cst_53 {dimension_numbers = #tpu.dot_dimension_numbers<[1], [0], [0], [1], [0, 0, 1, 1], [], []>} : vector<64x64xbf16>, vector<64x128xbf16>, vector<64x128xf32> -> vector<64x128xf32>
    %83 = arith.addf %72, %82 : vector<64x128xf32>
    %84 = vector.broadcast %2 : vector<64x1xf32> to vector<64x128xf32>
    %85 = arith.mulf %83, %84 : vector<64x128xf32>
    %c2_54 = arith.constant 2 : index
    %c0_55 = arith.constant 0 : index
    %c0_56 = arith.constant 0 : index
    %86 = vector.load %arg6[%c2_54, %c0_55, %c0_56] : memref<3x128x128xbf16, #tpu.memory_space<vmem>>, vector<1x128x128xbf16>
    %87 = vector.shape_cast %86 : vector<1x128x128xbf16> to vector<128x128xbf16>
    %cst_57 = arith.constant dense<0.000000e+00> : vector<64x128xf32>
    %88 = tpu.matmul %73, %87, %cst_57 {dimension_numbers = #tpu.dot_dimension_numbers<[1], [0], [0], [1], [0, 0, 1, 1], [], []>} : vector<64x128xbf16>, vector<128x128xbf16>, vector<64x128xf32> -> vector<64x128xf32>
    %89 = arith.truncf %85 : vector<64x128xf32> to vector<64x128xbf16>
    %c2_58 = arith.constant 2 : index
    %c0_59 = arith.constant 0 : index
    %c0_60 = arith.constant 0 : index
    %90 = vector.load %arg7[%c2_58, %c0_59, %c0_60] : memref<3x128x128xbf16, #tpu.memory_space<vmem>>, vector<1x128x128xbf16>
    %91 = vector.shape_cast %90 : vector<1x128x128xbf16> to vector<128x128xbf16>
    %cst_61 = arith.constant dense<0.000000e+00> : vector<64x128xf32>
    %92 = tpu.matmul %89, %91, %cst_61 {dimension_numbers = #tpu.dot_dimension_numbers<[1], [0], [0], [1], [0, 0, 1, 1], [], []>} : vector<64x128xbf16>, vector<128x128xbf16>, vector<64x128xf32> -> vector<64x128xf32>
    %93 = arith.addf %88, %92 : vector<64x128xf32>
    %c2_62 = arith.constant 2 : index
    %c0_63 = arith.constant 0 : index
    %c0_64 = arith.constant 0 : index
    %94 = vector.load %arg8[%c2_62, %c0_63, %c0_64] : memref<3x1x128xf32, #tpu.memory_space<vmem>>, vector<1x1x128xf32>
    %95 = vector.shape_cast %94 : vector<1x1x128xf32> to vector<1x128xf32>
    %96 = vector.broadcast %95 : vector<1x128xf32> to vector<64x128xf32>
    %97 = arith.addf %93, %96 : vector<64x128xf32>
    %c0_65 = arith.constant 0 : index
    %c0_66 = arith.constant 0 : index
    %98 = vector.load %arg9[%c0_65, %c0_66] : memref<64x128xf32, #tpu.memory_space<vmem>>, vector<64x128xf32>
    tpu.vector_store %arg9[%c0_65, %c0_66], %97 {strides = array<i32>} : memref<64x128xf32, #tpu.memory_space<vmem>>, vector<64x128xf32>,
    return
  }
  func.func @transform_0(%arg0: i32) -> (i32, i32) {
    %c0_i32 = arith.constant 0 : i32
    %c0_i32_0 = arith.constant 0 : i32
    %c0_i32_1 = arith.constant 0 : i32
    return %c0_i32, %c0_i32_0 : i32, i32
  }
  func.func @transform_1(%arg0: i32) -> (i32, i32) {
    %c0_i32 = arith.constant 0 : i32
    %c0_i32_0 = arith.constant 0 : i32
    %c0_i32_1 = arith.constant 0 : i32
    return %c0_i32, %c0_i32_0 : i32, i32
  }
  func.func @transform_2(%arg0: i32) -> (i32, i32) {
    %c0_i32 = arith.constant 0 : i32
    %c0_i32_0 = arith.constant 0 : i32
    %c0_i32_1 = arith.constant 0 : i32
    return %c0_i32, %c0_i32_0 : i32, i32
  }
  func.func @transform_3(%arg0: i32) -> (i32, i32, i32) {
    %c0_i32 = arith.constant 0 : i32
    %c0_i32_0 = arith.constant 0 : i32
    %c0_i32_1 = arith.constant 0 : i32
    %c0_i32_2 = arith.constant 0 : i32
    return %c0_i32, %c0_i32_0, %c0_i32_1 : i32, i32, i32
  }
  func.func @transform_4(%arg0: i32) -> (i32, i32, i32) {
    %c0_i32 = arith.constant 0 : i32
    %c0_i32_0 = arith.constant 0 : i32
    %c0_i32_1 = arith.constant 0 : i32
    %c0_i32_2 = arith.constant 0 : i32
    return %c0_i32, %c0_i32_0, %c0_i32_1 : i32, i32, i32
  }
  func.func @transform_5(%arg0: i32) -> (i32, i32, i32) {
    %c0_i32 = arith.constant 0 : i32
    %c0_i32_0 = arith.constant 0 : i32
    %c0_i32_1 = arith.constant 0 : i32
    %c0_i32_2 = arith.constant 0 : i32
    return %c0_i32, %c0_i32_0, %c0_i32_1 : i32, i32, i32
  }
  func.func @transform_6(%arg0: i32) -> (i32, i32, i32) {
    %c0_i32 = arith.constant 0 : i32
    %c0_i32_0 = arith.constant 0 : i32
    %c0_i32_1 = arith.constant 0 : i32
    %c0_i32_2 = arith.constant 0 : i32
    return %c0_i32, %c0_i32_0, %c0_i32_1 : i32, i32, i32
  }
  func.func @transform_7(%arg0: i32) -> (i32, i32, i32) {
    %c0_i32 = arith.constant 0 : i32
    %c0_i32_0 = arith.constant 0 : i32
    %c0_i32_1 = arith.constant 0 : i32
    %c0_i32_2 = arith.constant 0 : i32
    return %c0_i32, %c0_i32_0, %c0_i32_1 : i32, i32, i32
  }
  func.func @transform_8(%arg0: i32) -> (i32, i32) {
    %c0_i32 = arith.constant 0 : i32
    %c0_i32_0 = arith.constant 0 : i32
    %c0_i32_1 = arith.constant 0 : i32
    return %c0_i32, %c0_i32_0 : i32, i32
  }
}

</mosaic_0001>

<llo_original>
// kernel: tpu_custom_call.1
$region0: #{tpu_custom_call.1}
  #allocation0 [shape = 'u32[]', space=smem, size = 0x4, offset = 0x4, fixed_abs, tag = 'smem constant byte address 0x4 - core index']
  #allocation1 [shape = 'u32[72,128]{1,0:T(1,128)}', space=vmem, size = 0x9000, scoped, tag = 'internal scratch']
  %s0 = inlined_call_operand.vmem [shape: f32[64,128], index: 0, kind: input, shape index: {}]
  %s1 = inlined_call_operand.hbm [shape: bf16[64,64], index: 1, kind: input, shape index: {}]
  %s2 = inlined_call_operand.vmem [shape: f32[64,1], index: 2, kind: input, shape index: {}]
  %s3 = inlined_call_operand.hbm [shape: bf16[3,128,128], index: 3, kind: input, shape index: {}]
  %s4 = inlined_call_operand.hbm [shape: f32[3,1,128], index: 4, kind: input, shape index: {}]
  %s5 = inlined_call_operand.hbm [shape: bf16[3,128,128], index: 5, kind: input, shape index: {}]
  %s6 = inlined_call_operand.hbm [shape: bf16[3,128,128], index: 6, kind: input, shape index: {}]
  %s7 = inlined_call_operand.vmem [shape: f32[3,1,128], index: 7, kind: input, shape index: {}]
  %s8 = inlined_call_operand.hbm [shape: f32[64,128], index: 8, kind: output, shape index: {}]
  %s9 = sld [smem:[#allocation0]]
  $region62: #{tpu_custom_call.1} parent=0
    _
  %s11 = ssub.s32 1, %s9
  %s12 = scalar_select 0, %s11, %s9
  $region1: #{tpu_custom_call.1} parent=0
    #allocation2 [shape = 'u8[16384]{0}', space=vmem, size = 0x4000, scoped, tag = 'input window, operand 1, single buffered']
    #allocation3 [shape = 's32[1]{0}', space=sflag, size = 0x4, scoped, tag = 'scoped memory for tpu_custom_call.1']
    #allocation4 [shape = 's32[1]{0}', space=sflag, size = 0x4, scoped, tag = 'scoped memory for tpu_custom_call.1']
    #allocation5 [shape = 'u8[98304]{0}', space=vmem, size = 0x18000, scoped, tag = 'input window, operand 3, single buffered']
    #allocation6 [shape = 's32[1]{0}', space=sflag, size = 0x4, scoped, tag = 'scoped memory for tpu_custom_call.1']
    #allocation7 [shape = 'u8[1536]{0}', space=vmem, size = 0x800, scoped, tag = 'input window, operand 4, single buffered']
    #allocation8 [shape = 'u8[98304]{0}', space=vmem, size = 0x18000, scoped, tag = 'input window, operand 5, single buffered']
    #allocation9 [shape = 's32[1]{0}', space=sflag, size = 0x4, scoped, tag = 'scoped memory for tpu_custom_call.1']
    #allocation10 [shape = 'u8[98304]{0}', space=vmem, size = 0x18000, scoped, tag = 'input window, operand 6, single buffered']
    #allocation11 [shape = 'u8[32768]{0}', space=vmem, size = 0x8000, scoped, tag = 'output window, operand 0, single buffered']
    %13 = vsyncpa [#allocation3], 0
    %14 = vsyncpa [#allocation6], 0
    %15 = vsyncpa [#allocation9], 0
    %16 = vsyncpa [#allocation4], 0
    // Predicated region
    $region2: #{tpu_custom_call.1} parent=1 // pred_check
      _
    $region3: #{tpu_custom_call.1} parent=1 // pred_check_branch
      %18 = sbr.rel (0) target = $region5
    $region4: #{tpu_custom_call.1} parent=1 // pred_region
      _
    $region5: #{tpu_custom_call.1} parent=1 // pred_fallthru
      _
    // Predicated region
    $region6: #{tpu_custom_call.1} parent=1 // pred_check
      _
    $region7: #{tpu_custom_call.1} parent=1 // pred_check_branch
      %20 = sbr.rel (0) target = $region9
    $region8: #{tpu_custom_call.1} parent=1 // pred_region
      %22 = vsyncadd [#allocation3], 0
      %s23 = sshll.u32 %s1, 4
      %s24 = int_to_ptr.hbm [resolvable:$true] %s23
      %s25 = sshll.u32 [#allocation2], 4
      %s26 = int_to_ptr.vmem [resolvable:$true] %s25
      %31 = dma.hbm_to_vmem [thread:$0]  %s24, 512, %s26, [#allocation3], 64, 64, 4
    $region9: #{tpu_custom_call.1} parent=1 // pred_fallthru
      _
    // Predicated region
    $region10: #{tpu_custom_call.1} parent=1 // pred_check
      _
    $region11: #{tpu_custom_call.1} parent=1 // pred_check_branch
      %33 = sbr.rel (0) target = $region13
    $region12: #{tpu_custom_call.1} parent=1 // pred_region
      _
    $region13: #{tpu_custom_call.1} parent=1 // pred_fallthru
      _
    // Predicated region
    $region14: #{tpu_custom_call.1} parent=1 // pred_check
      _
    $region15: #{tpu_custom_call.1} parent=1 // pred_check_branch
      %35 = sbr.rel (0) target = $region17
    $region16: #{tpu_custom_call.1} parent=1 // pred_region
      %37 = vsyncadd [#allocation6], 0
      %s38 = sshll.u32 %s3, 4
      %s39 = int_to_ptr.hbm [resolvable:$true] %s38
      %s40 = sshll.u32 [#allocation5], 4
      %s41 = int_to_ptr.vmem [resolvable:$true] %s40
      %46 = dma.hbm_to_vmem [thread:$0]  %s39, 3072, %s41, [#allocation6], 64, 64, 4
    $region17: #{tpu_custom_call.1} parent=1 // pred_fallthru
      _
    // Predicated region
    $region18: #{tpu_custom_call.1} parent=1 // pred_check
      _
    $region19: #{tpu_custom_call.1} parent=1 // pred_check_branch
      %48 = sbr.rel (0) target = $region21
    $region20: #{tpu_custom_call.1} parent=1 // pred_region
      %50 = vsyncadd [#allocation6], 0
      %s51 = sshll.u32 %s4, 4
      %s52 = int_to_ptr.hbm [resolvable:$true] %s51
      %s53 = sshll.u32 [#allocation7], 4
      %s54 = int_to_ptr.vmem [resolvable:$true] %s53
      %59 = dma.hbm_to_vmem [thread:$0]  %s52, 48, %s54, [#allocation6], 16, 16, 1
    $region21: #{tpu_custom_call.1} parent=1 // pred_fallthru
      _
    // Predicated region
    $region22: #{tpu_custom_call.1} parent=1 // pred_check
      _
    $region23: #{tpu_custom_call.1} parent=1 // pred_check_branch
      %61 = sbr.rel (0) target = $region25
    $region24: #{tpu_custom_call.1} parent=1 // pred_region
      %63 = vsyncadd [#allocation9], 0
      %s64 = sshll.u32 %s5, 4
      %s65 = int_to_ptr.hbm [resolvable:$true] %s64
      %s66 = sshll.u32 [#allocation8], 4
      %s67 = int_to_ptr.vmem [resolvable:$true] %s66
      %72 = dma.hbm_to_vmem [thread:$0]  %s65, 3072, %s67, [#allocation9], 64, 64, 4
    $region25: #{tpu_custom_call.1} parent=1 // pred_fallthru
      _
    // Predicated region
    $region26: #{tpu_custom_call.1} parent=1 // pred_check
      _
    $region27: #{tpu_custom_call.1} parent=1 // pred_check_branch
      %74 = sbr.rel (0) target = $region29
    $region28: #{tpu_custom_call.1} parent=1 // pred_region
      %76 = vsyncadd [#allocation9], 0
      %s77 = sshll.u32 %s6, 4
      %s78 = int_to_ptr.hbm [resolvable:$true] %s77
      %s79 = sshll.u32 [#allocation10], 4
      %s80 = int_to_ptr.vmem [resolvable:$true] %s79
      %85 = dma.hbm_to_vmem [thread:$0]  %s78, 3072, %s80, [#allocation9], 64, 64, 4
    $region29: #{tpu_custom_call.1} parent=1 // pred_fallthru
      _
    // Predicated region
    $region30: #{tpu_custom_call.1} parent=1 // pred_check
      _
    $region31: #{tpu_custom_call.1} parent=1 // pred_check_branch
      %87 = sbr.rel (0) target = $region33
    $region32: #{tpu_custom_call.1} parent=1 // pred_region
      _
    $region33: #{tpu_custom_call.1} parent=1 // pred_fallthru
      _
    // Predicated region
    $region34: #{tpu_custom_call.1} parent=1 // pred_check
      _
    $region35: #{tpu_custom_call.1} parent=1 // pred_check_branch
      %89 = sbr.rel (0) target = $region37
    $region36: #{tpu_custom_call.1} parent=1 // pred_region
      %91 = dma.done [#allocation3], 512
    $region37: #{tpu_custom_call.1} parent=1 // pred_fallthru
      _
    // Predicated region
    $region38: #{tpu_custom_call.1} parent=1 // pred_check
      _
    $region39: #{tpu_custom_call.1} parent=1 // pred_check_branch
      %93 = sbr.rel (0) target = $region41
    $region40: #{tpu_custom_call.1} parent=1 // pred_region
      %95 = dma.done [#allocation6], 3072
    $region41: #{tpu_custom_call.1} parent=1 // pred_fallthru
      _
    // Predicated region
    $region42: #{tpu_custom_call.1} parent=1 // pred_check
      _
    $region43: #{tpu_custom_call.1} parent=1 // pred_check_branch
      %97 = sbr.rel (0) target = $region45
    $region44: #{tpu_custom_call.1} parent=1 // pred_region
      %99 = dma.done [#allocation6], 48
    $region45: #{tpu_custom_call.1} parent=1 // pred_fallthru
      _
    // Predicated region
    $region46: #{tpu_custom_call.1} parent=1 // pred_check
      _
    $region47: #{tpu_custom_call.1} parent=1 // pred_check_branch
      %101 = sbr.rel (0) target = $region49
    $region48: #{tpu_custom_call.1} parent=1 // pred_region
      %103 = dma.done [#allocation9], 3072
    $region49: #{tpu_custom_call.1} parent=1 // pred_fallthru
      _
    // Predicated region
    $region50: #{tpu_custom_call.1} parent=1 // pred_check
      _
    $region51: #{tpu_custom_call.1} parent=1 // pred_check_branch
      %105 = sbr.rel (0) target = $region53
    $region52: #{tpu_custom_call.1} parent=1 // pred_region
      %107 = dma.done [#allocation9], 3072
    $region53: #{tpu_custom_call.1} parent=1 // pred_fallthru
      _
    %v109 = vld [vmem:[%s0] sm:$0xff]
    %v110 = vld [vmem:[%s0 + $0x8] sm:$0xff]
    %v111 = vld [vmem:[%s0 + $0x10] sm:$0xff]
    %v112 = vld [vmem:[%s0 + $0x18] sm:$0xff]
    %v113 = vld [vmem:[%s0 + $0x20] sm:$0xff]
    %v114 = vld [vmem:[%s0 + $0x28] sm:$0xff]
    %v115 = vld [vmem:[%s0 + $0x30] sm:$0xff]
    %v116 = vld [vmem:[%s0 + $0x38] sm:$0xff]
    %v117 = vld [vmem:[#allocation2] sm:$0xf]
    %v118 = vld [vmem:[#allocation2 + $0x4] sm:$0xf]
    %v119 = vld [vmem:[#allocation2 + $0x8] sm:$0xf]
    %v120 = vld [vmem:[#allocation2 + $0xc] sm:$0xf]
    %v121 = vld [vmem:[#allocation2 + $0x10] sm:$0xf]
    %v122 = vld [vmem:[#allocation2 + $0x14] sm:$0xf]
    %v123 = vld [vmem:[#allocation2 + $0x18] sm:$0xf]
    %v124 = vld [vmem:[#allocation2 + $0x1c] sm:$0xf]
    %v125 = vld [vmem:[%s2] sm:$0xff]
    %v126 = vld [vmem:[%s2 + $0x8] sm:$0xff]
    %v127 = vld [vmem:[%s2 + $0x10] sm:$0xff]
    %v128 = vld [vmem:[%s2 + $0x18] sm:$0xff]
    %v129 = vld [vmem:[%s2 + $0x20] sm:$0xff]
    %v130 = vld [vmem:[%s2 + $0x28] sm:$0xff]
    %v131 = vld [vmem:[%s2 + $0x30] sm:$0xff]
    %v132 = vld [vmem:[%s2 + $0x38] sm:$0xff]
    %v133 = vpack.c.bf16 %v110, %v109
    %v134 = vpack.c.bf16 %v112, %v111
    %v135 = vpack.c.bf16 %v114, %v113
    %v136 = vpack.c.bf16 %v116, %v115
    %v137 = vld [vmem:[#allocation5] sm:$0xf]
    %v138 = vld [vmem:[#allocation5 + $0x4] sm:$0xf]
    %v139 = vld [vmem:[#allocation5 + $0x8] sm:$0xf]
    %v140 = vld [vmem:[#allocation5 + $0xc] sm:$0xf]
    %v141 = vld [vmem:[#allocation5 + $0x10] sm:$0xf]
    %v142 = vld [vmem:[#allocation5 + $0x14] sm:$0xf]
    %v143 = vld [vmem:[#allocation5 + $0x18] sm:$0xf]
    %v144 = vld [vmem:[#allocation5 + $0x1c] sm:$0xf]
    %v145 = vld [vmem:[#allocation5 + $0x20] sm:$0xf]
    %v146 = vld [vmem:[#allocation5 + $0x24] sm:$0xf]
    %v147 = vld [vmem:[#allocation5 + $0x28] sm:$0xf]
    %v148 = vld [vmem:[#allocation5 + $0x2c] sm:$0xf]
    %v149 = vld [vmem:[#allocation5 + $0x30] sm:$0xf]
    %v150 = vld [vmem:[#allocation5 + $0x34] sm:$0xf]
    %v151 = vld [vmem:[#allocation5 + $0x38] sm:$0xf]
    %v152 = vld [vmem:[#allocation5 + $0x3c] sm:$0xf]
    %v153 = vld [vmem:[#allocation7] sm:$0x1]
    %v155 = vperm.slane %v153, 0
    %v173 = vunpack.c.l.b16 %v137
    %v174 = vunpack.c.l.b16 %v138
    %v175 = vunpack.c.l.b16 %v139
    %v176 = vunpack.c.l.b16 %v140
    %v177 = vunpack.c.l.b16 %v141
    %v178 = vunpack.c.l.b16 %v142
    %v179 = vunpack.c.l.b16 %v143
    %v180 = vunpack.c.l.b16 %v144
    %v181 = vunpack.c.l.b16 %v145
    %v182 = vunpack.c.l.b16 %v146
    %v183 = vunpack.c.l.b16 %v147
    %v184 = vunpack.c.l.b16 %v148
    %v185 = vunpack.c.l.b16 %v149
    %v186 = vunpack.c.l.b16 %v150
    %v187 = vunpack.c.l.b16 %v151
    %v188 = vunpack.c.l.b16 %v152
    %v189 = vpack.c.b16 %v174, %v173
    %v190 = vpack.c.b16 %v176, %v175
    %v191 = vpack.c.b16 %v178, %v177
    %v192 = vpack.c.b16 %v180, %v179
    %v193 = vpack.c.b16 %v182, %v181
    %v194 = vpack.c.b16 %v184, %v183
    %v195 = vpack.c.b16 %v186, %v185
    %v196 = vpack.c.b16 %v188, %v187
    %205 = vmatpush.bf16.msra.mxu0 %v196
    %206 = vmatpush.bf16.msra.mxu0 %v195
    %207 = vmatpush.bf16.msra.mxu0 %v194
    %208 = vmatpush.bf16.msra.mxu0 %v193
    %209 = vmatpush.bf16.msra.mxu0 %v192
    %210 = vmatpush.bf16.msra.mxu0 %v191
    %211 = vmatpush.bf16.msra.mxu0 %v190
    %212 = vmatpush.bf16.msra.mxu0 %v189
    %213 = vmatmul.bf16.gmra.mxu0 %v133
    %v214 = vpop.f32.mrf.mxu0
    %v215 = vadd.f32 %v155, %v214
    %v216 = vpop.f32.mrf.mxu0
    %v217 = vadd.f32 %v155, %v216
    %218 = vmatmul.bf16.gmra.mxu0 %v134
    %v219 = vpop.f32.mrf.mxu0
    %v220 = vadd.f32 %v155, %v219
    %v221 = vpop.f32.mrf.mxu0
    %v222 = vadd.f32 %v155, %v221
    %223 = vmatmul.bf16.gmra.mxu0 %v135
    %v224 = vpop.f32.mrf.mxu0
    %v225 = vadd.f32 %v155, %v224
    %v226 = vpop.f32.mrf.mxu0
    %v227 = vadd.f32 %v155, %v226
    %228 = vmatmul.bf16.gmra.mxu0 %v136
    %v229 = vpop.f32.mrf.mxu0
    %v230 = vadd.f32 %v155, %v229
    %v231 = vpop.f32.mrf.mxu0
    %v232 = vadd.f32 %v155, %v231
    %233 = vdwg.mxu0
    %v234 = vpack.c.bf16 %v217, %v215
    %v235 = vpack.c.bf16 %v222, %v220
    %v236 = vpack.c.bf16 %v227, %v225
    %v237 = vpack.c.bf16 %v232, %v230
    %v246 = vunpack.c.l.b16 %v117
    %v247 = vunpack.c.l.b16 %v118
    %v248 = vunpack.c.l.b16 %v119
    %v249 = vunpack.c.l.b16 %v120
    %v250 = vunpack.c.l.b16 %v121
    %v251 = vunpack.c.l.b16 %v122
    %v252 = vunpack.c.l.b16 %v123
    %v253 = vunpack.c.l.b16 %v124
    %v254 = vpack.c.b16 %v247, %v246
    %v255 = vpack.c.b16 %v249, %v248
    %v256 = vpack.c.b16 %v251, %v250
    %v257 = vpack.c.b16 %v253, %v252
    %vm258 = vcmask 523264
    %v260 = vsel %vm258, %v254, 0
    %v263 = vsel %vm258, %v255, 0
    %v266 = vsel %vm258, %v256, 0
    %v269 = vsel %vm258, %v257, 0
    %271 = vmatpush.bf16.msra.mxu0 0
    %272 = vmatpush.bf16.msra.mxu0 0
    %273 = vmatpush.bf16.msra.mxu0 0
    %274 = vmatpush.bf16.msra.mxu0 0
    %275 = vmatpush.bf16.msra.mxu0 %v237
    %276 = vmatpush.bf16.msra.mxu0 %v236
    %277 = vmatpush.bf16.msra.mxu0 %v235
    %278 = vmatpush.bf16.msra.mxu0 %v234
    %279 = vmatmul.bf16.gmra.mxu0 %v260
    %v280 = vpop.f32.mrf.mxu0
    %v281 = vadd.f32 0.0, %v280
    %v282 = vpop.f32.mrf.mxu0
    %v283 = vadd.f32 0.0, %v282
    %284 = vmatmul.bf16.gmra.mxu0 %v263
    %v285 = vpop.f32.mrf.mxu0
    %v286 = vadd.f32 0.0, %v285
    %v287 = vpop.f32.mrf.mxu0
    %v288 = vadd.f32 0.0, %v287
    %289 = vmatmul.bf16.gmra.mxu0 %v266
    %v290 = vpop.f32.mrf.mxu0
    %v291 = vadd.f32 0.0, %v290
    %v292 = vpop.f32.mrf.mxu0
    %v293 = vadd.f32 0.0, %v292
    %294 = vmatmul.bf16.gmra.mxu0 %v269
    %v295 = vpop.f32.mrf.mxu0
    %v296 = vadd.f32 0.0, %v295
    %v297 = vpop.f32.mrf.mxu0
    %v298 = vadd.f32 0.0, %v297
    %299 = vdwg.mxu0
    %v300 = vadd.f32 %v109, %v281
    %v301 = vadd.f32 %v110, %v283
    %v302 = vadd.f32 %v111, %v286
    %v303 = vadd.f32 %v112, %v288
    %v304 = vadd.f32 %v113, %v291
    %v305 = vadd.f32 %v114, %v293
    %v306 = vadd.f32 %v115, %v296
    %v307 = vadd.f32 %v116, %v298
    %309 = vset.pattern.permute.xlu0 0
    %310 = vperm.xlu0 %309, %v125
    %v311 = vpop.permute.xlu0 %310
    %314 = vset.pattern.permute.xlu0 0
    %315 = vperm.xlu0 %314, %v126
    %v316 = vpop.permute.xlu0 %315
    %319 = vset.pattern.permute.xlu0 0
    %320 = vperm.xlu0 %319, %v127
    %v321 = vpop.permute.xlu0 %320
    %324 = vset.pattern.permute.xlu0 0
    %325 = vperm.xlu0 %324, %v128
    %v326 = vpop.permute.xlu0 %325
    %329 = vset.pattern.permute.xlu0 0
    %330 = vperm.xlu0 %329, %v129
    %v331 = vpop.permute.xlu0 %330
    %334 = vset.pattern.permute.xlu0 0
    %335 = vperm.xlu0 %334, %v130
    %v336 = vpop.permute.xlu0 %335
    %339 = vset.pattern.permute.xlu0 0
    %340 = vperm.xlu0 %339, %v131
    %v341 = vpop.permute.xlu0 %340
    %344 = vset.pattern.permute.xlu0 0
    %345 = vperm.xlu0 %344, %v132
    %v346 = vpop.permute.xlu0 %345
    %v348 = vmul.f32 %v300, %v311
    %v349 = vmul.f32 %v301, %v316
    %v350 = vmul.f32 %v302, %v321
    %v351 = vmul.f32 %v303, %v326
    %v352 = vmul.f32 %v304, %v331
    %v353 = vmul.f32 %v305, %v336
    %v354 = vmul.f32 %v306, %v341
    %v355 = vmul.f32 %v307, %v346
    %v356 = vld [vmem:[#allocation8] sm:$0xf]
    %v357 = vld [vmem:[#allocation8 + $0x4] sm:$0xf]
    %v358 = vld [vmem:[#allocation8 + $0x8] sm:$0xf]
    %v359 = vld [vmem:[#allocation8 + $0xc] sm:$0xf]
    %v360 = vld [vmem:[#allocation8 + $0x10] sm:$0xf]
    %v361 = vld [vmem:[#allocation8 + $0x14] sm:$0xf]
    %v362 = vld [vmem:[#allocation8 + $0x18] sm:$0xf]
    %v363 = vld [vmem:[#allocation8 + $0x1c] sm:$0xf]
    %v364 = vld [vmem:[#allocation8 + $0x20] sm:$0xf]
    %v365 = vld [vmem:[#allocation8 + $0x24] sm:$0xf]
    %v366 = vld [vmem:[#allocation8 + $0x28] sm:$0xf]
    %v367 = vld [vmem:[#allocation8 + $0x2c] sm:$0xf]
    %v368 = vld [vmem:[#allocation8 + $0x30] sm:$0xf]
    %v369 = vld [vmem:[#allocation8 + $0x34] sm:$0xf]
    %v370 = vld [vmem:[#allocation8 + $0x38] sm:$0xf]
    %v371 = vld [vmem:[#allocation8 + $0x3c] sm:$0xf]
    %v372 = vpack.c.bf16 %v349, %v348
    %v373 = vpack.c.bf16 %v351, %v350
    %v374 = vpack.c.bf16 %v353, %v352
    %v375 = vpack.c.bf16 %v355, %v354
    %v376 = vld [vmem:[#allocation10] sm:$0xf]
    %v377 = vld [vmem:[#allocation10 + $0x4] sm:$0xf]
    %v378 = vld [vmem:[#allocation10 + $0x8] sm:$0xf]
    %v379 = vld [vmem:[#allocation10 + $0xc] sm:$0xf]
    %v380 = vld [vmem:[#allocation10 + $0x10] sm:$0xf]
    %v381 = vld [vmem:[#allocation10 + $0x14] sm:$0xf]
    %v382 = vld [vmem:[#allocation10 + $0x18] sm:$0xf]
    %v383 = vld [vmem:[#allocation10 + $0x1c] sm:$0xf]
    %v384 = vld [vmem:[#allocation10 + $0x20] sm:$0xf]
    %v385 = vld [vmem:[#allocation10 + $0x24] sm:$0xf]
    %v386 = vld [vmem:[#allocation10 + $0x28] sm:$0xf]
    %v387 = vld [vmem:[#allocation10 + $0x2c] sm:$0xf]
    %v388 = vld [vmem:[#allocation10 + $0x30] sm:$0xf]
    %v389 = vld [vmem:[#allocation10 + $0x34] sm:$0xf]
    %v390 = vld [vmem:[#allocation10 + $0x38] sm:$0xf]
    %v391 = vld [vmem:[#allocation10 + $0x3c] sm:$0xf]
    %v408 = vunpack.c.l.b16 %v376
    %v409 = vunpack.c.l.b16 %v377
    %v410 = vunpack.c.l.b16 %v378
    %v411 = vunpack.c.l.b16 %v379
    %v412 = vunpack.c.l.b16 %v380
    %v413 = vunpack.c.l.b16 %v381
    %v414 = vunpack.c.l.b16 %v382
    %v415 = vunpack.c.l.b16 %v383
    %v416 = vunpack.c.l.b16 %v384
    %v417 = vunpack.c.l.b16 %v385
    %v418 = vunpack.c.l.b16 %v386
    %v419 = vunpack.c.l.b16 %v387
    %v420 = vunpack.c.l.b16 %v388
    %v421 = vunpack.c.l.b16 %v389
    %v422 = vunpack.c.l.b16 %v390
    %v423 = vunpack.c.l.b16 %v391
    %v424 = vpack.c.b16 %v409, %v408
    %v425 = vpack.c.b16 %v411, %v410
    %v426 = vpack.c.b16 %v413, %v412
    %v427 = vpack.c.b16 %v415, %v414
    %v428 = vpack.c.b16 %v417, %v416
    %v429 = vpack.c.b16 %v419, %v418
    %v430 = vpack.c.b16 %v421, %v420
    %v431 = vpack.c.b16 %v423, %v422
    %440 = vmatpush.bf16.msra.mxu0 %v431
    %441 = vmatpush.bf16.msra.mxu0 %v430
    %442 = vmatpush.bf16.msra.mxu0 %v429
    %443 = vmatpush.bf16.msra.mxu0 %v428
    %444 = vmatpush.bf16.msra.mxu0 %v427
    %445 = vmatpush.bf16.msra.mxu0 %v426
    %446 = vmatpush.bf16.msra.mxu0 %v425
    %447 = vmatpush.bf16.msra.mxu0 %v424
    %448 = vmatmul.bf16.gmra.mxu0 %v372
    %v449 = vpop.f32.mrf.mxu0
    %v450 = vadd.f32 0.0, %v449
    %v451 = vpop.f32.mrf.mxu0
    %v452 = vadd.f32 0.0, %v451
    %453 = vmatmul.bf16.gmra.mxu0 %v373
    %v454 = vpop.f32.mrf.mxu0
    %v455 = vadd.f32 0.0, %v454
    %v456 = vpop.f32.mrf.mxu0
    %v457 = vadd.f32 0.0, %v456
    %458 = vmatmul.bf16.gmra.mxu0 %v374
    %v459 = vpop.f32.mrf.mxu0
    %v460 = vadd.f32 0.0, %v459
    %v461 = vpop.f32.mrf.mxu0
    %v462 = vadd.f32 0.0, %v461
    %463 = vmatmul.bf16.gmra.mxu0 %v375
    %v464 = vpop.f32.mrf.mxu0
    %v465 = vadd.f32 0.0, %v464
    %v466 = vpop.f32.mrf.mxu0
    %v467 = vadd.f32 0.0, %v466
    %468 = vdwg.mxu0
    %v485 = vunpack.c.l.b16 %v356
    %v486 = vunpack.c.l.b16 %v357
    %v487 = vunpack.c.l.b16 %v358
    %v488 = vunpack.c.l.b16 %v359
    %v489 = vunpack.c.l.b16 %v360
    %v490 = vunpack.c.l.b16 %v361
    %v491 = vunpack.c.l.b16 %v362
    %v492 = vunpack.c.l.b16 %v363
    %v493 = vunpack.c.l.b16 %v364
    %v494 = vunpack.c.l.b16 %v365
    %v495 = vunpack.c.l.b16 %v366
    %v496 = vunpack.c.l.b16 %v367
    %v497 = vunpack.c.l.b16 %v368
    %v498 = vunpack.c.l.b16 %v369
    %v499 = vunpack.c.l.b16 %v370
    %v500 = vunpack.c.l.b16 %v371
    %v501 = vpack.c.b16 %v486, %v485
    %v502 = vpack.c.b16 %v488, %v487
    %v503 = vpack.c.b16 %v490, %v489
    %v504 = vpack.c.b16 %v492, %v491
    %v505 = vpack.c.b16 %v494, %v493
    %v506 = vpack.c.b16 %v496, %v495
    %v507 = vpack.c.b16 %v498, %v497
    %v508 = vpack.c.b16 %v500, %v499
    %517 = vmatpush.bf16.msra.mxu0 %v508
    %518 = vmatpush.bf16.msra.mxu0 %v507
    %519 = vmatpush.bf16.msra.mxu0 %v506
    %520 = vmatpush.bf16.msra.mxu0 %v505
    %521 = vmatpush.bf16.msra.mxu0 %v504
    %522 = vmatpush.bf16.msra.mxu0 %v503
    %523 = vmatpush.bf16.msra.mxu0 %v502
    %524 = vmatpush.bf16.msra.mxu0 %v501
    %525 = vmatmul.bf16.gmra.mxu0 %v133
    %v526 = vpop.f32.mrf.mxu0
    %v527 = vadd.f32 %v450, %v526
    %v528 = vpop.f32.mrf.mxu0
    %v529 = vadd.f32 %v452, %v528
    %530 = vmatmul.bf16.gmra.mxu0 %v134
    %v531 = vpop.f32.mrf.mxu0
    %v532 = vadd.f32 %v455, %v531
    %v533 = vpop.f32.mrf.mxu0
    %v534 = vadd.f32 %v457, %v533
    %535 = vmatmul.bf16.gmra.mxu0 %v135
    %v536 = vpop.f32.mrf.mxu0
    %v537 = vadd.f32 %v460, %v536
    %v538 = vpop.f32.mrf.mxu0
    %v539 = vadd.f32 %v462, %v538
    %540 = vmatmul.bf16.gmra.mxu0 %v136
    %v541 = vpop.f32.mrf.mxu0
    %v542 = vadd.f32 %v465, %v541
    %v543 = vpop.f32.mrf.mxu0
    %v544 = vadd.f32 %v467, %v543
    %545 = vdwg.mxu0
    %v546 = vld [vmem:[%s7] sm:$0x1]
    %v548 = vperm.slane %v546, 0
    %v550 = vadd.f32 %v527, %v548
    %v551 = vadd.f32 %v529, %v548
    %v552 = vadd.f32 %v532, %v548
    %v553 = vadd.f32 %v534, %v548
    %v554 = vadd.f32 %v537, %v548
    %v555 = vadd.f32 %v539, %v548
    %v556 = vadd.f32 %v542, %v548
    %v557 = vadd.f32 %v544, %v548
    %v558 = vmax.f32 %v550, 0.0
    %v559 = vmax.f32 %v551, 0.0
    %v560 = vmax.f32 %v552, 0.0
    %v561 = vmax.f32 %v553, 0.0
    %v562 = vmax.f32 %v554, 0.0
    %v563 = vmax.f32 %v555, 0.0
    %v564 = vmax.f32 %v556, 0.0
    %v565 = vmax.f32 %v557, 0.0
    %v566 = vmul.f32 %v558, %v558
    %v567 = vmul.f32 %v559, %v559
    %v568 = vmul.f32 %v560, %v560
    %v569 = vmul.f32 %v561, %v561
    %v570 = vmul.f32 %v562, %v562
    %v571 = vmul.f32 %v563, %v563
    %v572 = vmul.f32 %v564, %v564
    %v573 = vmul.f32 %v565, %v565
    %574 = vadd.xlane.f32.xlu0 %v566
    %v575 = vpop.xlane.xlu0 %574
    %576 = vadd.xlane.f32.xlu0 %v567
    %v577 = vpop.xlane.xlu0 %576
    %578 = vadd.xlane.f32.xlu0 %v568
    %v579 = vpop.xlane.xlu0 %578
    %580 = vadd.xlane.f32.xlu0 %v569
    %v581 = vpop.xlane.xlu0 %580
    %582 = vadd.xlane.f32.xlu0 %v570
    %v583 = vpop.xlane.xlu0 %582
    %584 = vadd.xlane.f32.xlu0 %v571
    %v585 = vpop.xlane.xlu0 %584
    %586 = vadd.xlane.f32.xlu0 %v572
    %v587 = vpop.xlane.xlu0 %586
    %588 = vadd.xlane.f32.xlu0 %v573
    %v589 = vpop.xlane.xlu0 %588
    %v590 = vmax.f32 %v575, 1e-24
    %v591 = vmax.f32 %v577, 1e-24
    %v592 = vmax.f32 %v579, 1e-24
    %v593 = vmax.f32 %v581, 1e-24
    %v594 = vmax.f32 %v583, 1e-24
    %v595 = vmax.f32 %v585, 1e-24
    %v596 = vmax.f32 %v587, 1e-24
    %v597 = vmax.f32 %v589, 1e-24
    %v598 = vrsqrt.pop %v590
    %v599 = vmul.f32 %v598, %v590
    %v600 = vmul.f32 %v599, %v598
    %v601 = vmul.f32 0.5, %v600
    %v602 = vsub.f32 1.5, %v601
    %v603 = vmul.f32 %v598, %v602
    %vm604 = vweird.f32 %v590
    %vm605 = vweird.f32 %v598
    %vm606 = vmor %vm604, %vm605
    %v607 = vsel %vm606, %v598, %v603
    %v608 = vrsqrt.pop %v591
    %v609 = vmul.f32 %v608, %v591
    %v610 = vmul.f32 %v609, %v608
    %v611 = vmul.f32 0.5, %v610
    %v612 = vsub.f32 1.5, %v611
    %v613 = vmul.f32 %v608, %v612
    %vm614 = vweird.f32 %v591
    %vm615 = vweird.f32 %v608
    %vm616 = vmor %vm614, %vm615
    %v617 = vsel %vm616, %v608, %v613
    %v618 = vrsqrt.pop %v592
    %v619 = vmul.f32 %v618, %v592
    %v620 = vmul.f32 %v619, %v618
    %v621 = vmul.f32 0.5, %v620
    %v622 = vsub.f32 1.5, %v621
    %v623 = vmul.f32 %v618, %v622
    %vm624 = vweird.f32 %v592
    %vm625 = vweird.f32 %v618
    %vm626 = vmor %vm624, %vm625
    %v627 = vsel %vm626, %v618, %v623
    %v628 = vrsqrt.pop %v593
    %v629 = vmul.f32 %v628, %v593
    %v630 = vmul.f32 %v629, %v628
    %v631 = vmul.f32 0.5, %v630
    %v632 = vsub.f32 1.5, %v631
    %v633 = vmul.f32 %v628, %v632
    %vm634 = vweird.f32 %v593
    %vm635 = vweird.f32 %v628
    %vm636 = vmor %vm634, %vm635
    %v637 = vsel %vm636, %v628, %v633
    %v638 = vrsqrt.pop %v594
    %v639 = vmul.f32 %v638, %v594
    %v640 = vmul.f32 %v639, %v638
    %v641 = vmul.f32 0.5, %v640
    %v642 = vsub.f32 1.5, %v641
    %v643 = vmul.f32 %v638, %v642
    %vm644 = vweird.f32 %v594
    %vm645 = vweird.f32 %v638
    %vm646 = vmor %vm644, %vm645
    %v647 = vsel %vm646, %v638, %v643
    %v648 = vrsqrt.pop %v595
    %v649 = vmul.f32 %v648, %v595
    %v650 = vmul.f32 %v649, %v648
    %v651 = vmul.f32 0.5, %v650
    %v652 = vsub.f32 1.5, %v651
    %v653 = vmul.f32 %v648, %v652
    %vm654 = vweird.f32 %v595
    %vm655 = vweird.f32 %v648
    %vm656 = vmor %vm654, %vm655
    %v657 = vsel %vm656, %v648, %v653
    %v658 = vrsqrt.pop %v596
    %v659 = vmul.f32 %v658, %v596
    %v660 = vmul.f32 %v659, %v658
    %v661 = vmul.f32 0.5, %v660
    %v662 = vsub.f32 1.5, %v661
    %v663 = vmul.f32 %v658, %v662
    %vm664 = vweird.f32 %v596
    %vm665 = vweird.f32 %v658
    %vm666 = vmor %vm664, %vm665
    %v667 = vsel %vm666, %v658, %v663
    %v668 = vrsqrt.pop %v597
    %v669 = vmul.f32 %v668, %v597
    %v670 = vmul.f32 %v669, %v668
    %v671 = vmul.f32 0.5, %v670
    %v672 = vsub.f32 1.5, %v671
    %v673 = vmul.f32 %v668, %v672
    %vm674 = vweird.f32 %v597
    %vm675 = vweird.f32 %v668
    %vm676 = vmor %vm674, %vm675
    %v677 = vsel %vm676, %v668, %v673
    %v678 = vmul.f32 %v558, %v607
    %v679 = vmul.f32 %v559, %v617
    %v680 = vmul.f32 %v560, %v627
    %v681 = vmul.f32 %v561, %v637
    %v682 = vmul.f32 %v562, %v647
    %v683 = vmul.f32 %v563, %v657
    %v684 = vmul.f32 %v564, %v667
    %v685 = vmul.f32 %v565, %v677
    %v686 = vpack.c.bf16 %v679, %v678
    %v687 = vpack.c.bf16 %v681, %v680
    %v688 = vpack.c.bf16 %v683, %v682
    %v689 = vpack.c.bf16 %v685, %v684
    %s690 = scalar_lea.vmem [#allocation5], 64
    %v691 = vld [vmem:[%s690] sm:$0xf]
    %v692 = vld [vmem:[%s690 + $0x4] sm:$0xf]
    %v693 = vld [vmem:[%s690 + $0x8] sm:$0xf]
    %v694 = vld [vmem:[%s690 + $0xc] sm:$0xf]
    %v695 = vld [vmem:[%s690 + $0x10] sm:$0xf]
    %v696 = vld [vmem:[%s690 + $0x14] sm:$0xf]
    %v697 = vld [vmem:[%s690 + $0x18] sm:$0xf]
    %v698 = vld [vmem:[%s690 + $0x1c] sm:$0xf]
    %v699 = vld [vmem:[%s690 + $0x20] sm:$0xf]
    %v700 = vld [vmem:[%s690 + $0x24] sm:$0xf]
    %v701 = vld [vmem:[%s690 + $0x28] sm:$0xf]
    %v702 = vld [vmem:[%s690 + $0x2c] sm:$0xf]
    %v703 = vld [vmem:[%s690 + $0x30] sm:$0xf]
    %v704 = vld [vmem:[%s690 + $0x34] sm:$0xf]
    %v705 = vld [vmem:[%s690 + $0x38] sm:$0xf]
    %v706 = vld [vmem:[%s690 + $0x3c] sm:$0xf]
    %s707 = scalar_lea.vmem [#allocation7], 1
    %v708 = vld [vmem:[%s707] sm:$0x1]
    %v710 = vperm.slane %v708, 0
    %v728 = vunpack.c.l.b16 %v691
    %v729 = vunpack.c.l.b16 %v692
    %v730 = vunpack.c.l.b16 %v693
    %v731 = vunpack.c.l.b16 %v694
    %v732 = vunpack.c.l.b16 %v695
    %v733 = vunpack.c.l.b16 %v696
    %v734 = vunpack.c.l.b16 %v697
    %v735 = vunpack.c.l.b16 %v698
    %v736 = vunpack.c.l.b16 %v699
    %v737 = vunpack.c.l.b16 %v700
    %v738 = vunpack.c.l.b16 %v701
    %v739 = vunpack.c.l.b16 %v702
    %v740 = vunpack.c.l.b16 %v703
    %v741 = vunpack.c.l.b16 %v704
    %v742 = vunpack.c.l.b16 %v705
    %v743 = vunpack.c.l.b16 %v706
    %v744 = vpack.c.b16 %v729, %v728
    %v745 = vpack.c.b16 %v731, %v730
    %v746 = vpack.c.b16 %v733, %v732
    %v747 = vpack.c.b16 %v735, %v734
    %v748 = vpack.c.b16 %v737, %v736
    %v749 = vpack.c.b16 %v739, %v738
    %v750 = vpack.c.b16 %v741, %v740
    %v751 = vpack.c.b16 %v743, %v742
    %760 = vmatpush.bf16.msra.mxu0 %v751
    %761 = vmatpush.bf16.msra.mxu0 %v750
    %762 = vmatpush.bf16.msra.mxu0 %v749
    %763 = vmatpush.bf16.msra.mxu0 %v748
    %764 = vmatpush.bf16.msra.mxu0 %v747
    %765 = vmatpush.bf16.msra.mxu0 %v746
    %766 = vmatpush.bf16.msra.mxu0 %v745
    %767 = vmatpush.bf16.msra.mxu0 %v744
    %768 = vmatmul.bf16.gmra.mxu0 %v686
    %v769 = vpop.f32.mrf.mxu0
    %v770 = vadd.f32 %v710, %v769
    %v771 = vpop.f32.mrf.mxu0
    %v772 = vadd.f32 %v710, %v771
    %773 = vmatmul.bf16.gmra.mxu0 %v687
    %v774 = vpop.f32.mrf.mxu0
    %v775 = vadd.f32 %v710, %v774
    %v776 = vpop.f32.mrf.mxu0
    %v777 = vadd.f32 %v710, %v776
    %778 = vmatmul.bf16.gmra.mxu0 %v688
    %v779 = vpop.f32.mrf.mxu0
    %v780 = vadd.f32 %v710, %v779
    %v781 = vpop.f32.mrf.mxu0
    %v782 = vadd.f32 %v710, %v781
    %783 = vmatmul.bf16.gmra.mxu0 %v689
    %v784 = vpop.f32.mrf.mxu0
    %v785 = vadd.f32 %v710, %v784
    %v786 = vpop.f32.mrf.mxu0
    %v787 = vadd.f32 %v710, %v786
    %788 = vdwg.mxu0
    %v789 = vpack.c.bf16 %v772, %v770
    %v790 = vpack.c.bf16 %v777, %v775
    %v791 = vpack.c.bf16 %v782, %v780
    %v792 = vpack.c.bf16 %v787, %v785
    %793 = vmatpush.bf16.msra.mxu0 0
    %794 = vmatpush.bf16.msra.mxu0 0
    %795 = vmatpush.bf16.msra.mxu0 0
    %796 = vmatpush.bf16.msra.mxu0 0
    %797 = vmatpush.bf16.msra.mxu0 %v792
    %798 = vmatpush.bf16.msra.mxu0 %v791
    %799 = vmatpush.bf16.msra.mxu0 %v790
    %800 = vmatpush.bf16.msra.mxu0 %v789
    %801 = vmatmul.bf16.gmra.mxu0 %v260
    %v802 = vpop.f32.mrf.mxu0
    %v803 = vadd.f32 0.0, %v802
    %v804 = vpop.f32.mrf.mxu0
    %v805 = vadd.f32 0.0, %v804
    %806 = vmatmul.bf16.gmra.mxu0 %v263
    %v807 = vpop.f32.mrf.mxu0
    %v808 = vadd.f32 0.0, %v807
    %v809 = vpop.f32.mrf.mxu0
    %v810 = vadd.f32 0.0, %v809
    %811 = vmatmul.bf16.gmra.mxu0 %v266
    %v812 = vpop.f32.mrf.mxu0
    %v813 = vadd.f32 0.0, %v812
    %v814 = vpop.f32.mrf.mxu0
    %v815 = vadd.f32 0.0, %v814
    %816 = vmatmul.bf16.gmra.mxu0 %v269
    %v817 = vpop.f32.mrf.mxu0
    %v818 = vadd.f32 0.0, %v817
    %v819 = vpop.f32.mrf.mxu0
    %v820 = vadd.f32 0.0, %v819
    %821 = vdwg.mxu0
    %v822 = vadd.f32 %v678, %v803
    %v823 = vadd.f32 %v679, %v805
    %v824 = vadd.f32 %v680, %v808
    %v825 = vadd.f32 %v681, %v810
    %v826 = vadd.f32 %v682, %v813
    %v827 = vadd.f32 %v683, %v815
    %v828 = vadd.f32 %v684, %v818
    %v829 = vadd.f32 %v685, %v820
    %v830 = vmul.f32 %v822, %v311
    %v831 = vmul.f32 %v823, %v316
    %v832 = vmul.f32 %v824, %v321
    %v833 = vmul.f32 %v825, %v326
    %v834 = vmul.f32 %v826, %v331
    %v835 = vmul.f32 %v827, %v336
    %v836 = vmul.f32 %v828, %v341
    %v837 = vmul.f32 %v829, %v346
    %s838 = scalar_lea.vmem [#allocation8], 64
    %v839 = vld [vmem:[%s838] sm:$0xf]
    %v840 = vld [vmem:[%s838 + $0x4] sm:$0xf]
    %v841 = vld [vmem:[%s838 + $0x8] sm:$0xf]
    %v842 = vld [vmem:[%s838 + $0xc] sm:$0xf]
    %v843 = vld [vmem:[%s838 + $0x10] sm:$0xf]
    %v844 = vld [vmem:[%s838 + $0x14] sm:$0xf]
    %v845 = vld [vmem:[%s838 + $0x18] sm:$0xf]
    %v846 = vld [vmem:[%s838 + $0x1c] sm:$0xf]
    %v847 = vld [vmem:[%s838 + $0x20] sm:$0xf]
    %v848 = vld [vmem:[%s838 + $0x24] sm:$0xf]
    %v849 = vld [vmem:[%s838 + $0x28] sm:$0xf]
    %v850 = vld [vmem:[%s838 + $0x2c] sm:$0xf]
    %v851 = vld [vmem:[%s838 + $0x30] sm:$0xf]
    %v852 = vld [vmem:[%s838 + $0x34] sm:$0xf]
    %v853 = vld [vmem:[%s838 + $0x38] sm:$0xf]
    %v854 = vld [vmem:[%s838 + $0x3c] sm:$0xf]
    %v855 = vpack.c.bf16 %v831, %v830
    %v856 = vpack.c.bf16 %v833, %v832
    %v857 = vpack.c.bf16 %v835, %v834
    %v858 = vpack.c.bf16 %v837, %v836
    %s859 = scalar_lea.vmem [#allocation10], 64
    %v860 = vld [vmem:[%s859] sm:$0xf]
    %v861 = vld [vmem:[%s859 + $0x4] sm:$0xf]
    %v862 = vld [vmem:[%s859 + $0x8] sm:$0xf]
    %v863 = vld [vmem:[%s859 + $0xc] sm:$0xf]
    %v864 = vld [vmem:[%s859 + $0x10] sm:$0xf]
    %v865 = vld [vmem:[%s859 + $0x14] sm:$0xf]
    %v866 = vld [vmem:[%s859 + $0x18] sm:$0xf]
    %v867 = vld [vmem:[%s859 + $0x1c] sm:$0xf]
    %v868 = vld [vmem:[%s859 + $0x20] sm:$0xf]
    %v869 = vld [vmem:[%s859 + $0x24] sm:$0xf]
    %v870 = vld [vmem:[%s859 + $0x28] sm:$0xf]
    %v871 = vld [vmem:[%s859 + $0x2c] sm:$0xf]
    %v872 = vld [vmem:[%s859 + $0x30] sm:$0xf]
    %v873 = vld [vmem:[%s859 + $0x34] sm:$0xf]
    %v874 = vld [vmem:[%s859 + $0x38] sm:$0xf]
    %v875 = vld [vmem:[%s859 + $0x3c] sm:$0xf]
    %v892 = vunpack.c.l.b16 %v860
    %v893 = vunpack.c.l.b16 %v861
    %v894 = vunpack.c.l.b16 %v862
    %v895 = vunpack.c.l.b16 %v863
    %v896 = vunpack.c.l.b16 %v864
    %v897 = vunpack.c.l.b16 %v865
    %v898 = vunpack.c.l.b16 %v866
    %v899 = vunpack.c.l.b16 %v867
    %v900 = vunpack.c.l.b16 %v868
    %v901 = vunpack.c.l.b16 %v869
    %v902 = vunpack.c.l.b16 %v870
    %v903 = vunpack.c.l.b16 %v871
    %v904 = vunpack.c.l.b16 %v872
    %v905 = vunpack.c.l.b16 %v873
    %v906 = vunpack.c.l.b16 %v874
    %v907 = vunpack.c.l.b16 %v875
    %v908 = vpack.c.b16 %v893, %v892
    %v909 = vpack.c.b16 %v895, %v894
    %v910 = vpack.c.b16 %v897, %v896
    %v911 = vpack.c.b16 %v899, %v898
    %v912 = vpack.c.b16 %v901, %v900
    %v913 = vpack.c.b16 %v903, %v902
    %v914 = vpack.c.b16 %v905, %v904
    %v915 = vpack.c.b16 %v907, %v906
    %924 = vmatpush.bf16.msra.mxu0 %v915
    %925 = vmatpush.bf16.msra.mxu0 %v914
    %926 = vmatpush.bf16.msra.mxu0 %v913
    %927 = vmatpush.bf16.msra.mxu0 %v912
    %928 = vmatpush.bf16.msra.mxu0 %v911
    %929 = vmatpush.bf16.msra.mxu0 %v910
    %930 = vmatpush.bf16.msra.mxu0 %v909
    %931 = vmatpush.bf16.msra.mxu0 %v908
    %932 = vmatmul.bf16.gmra.mxu0 %v855
    %v933 = vpop.f32.mrf.mxu0
    %v934 = vadd.f32 0.0, %v933
    %v935 = vpop.f32.mrf.mxu0
    %v936 = vadd.f32 0.0, %v935
    %937 = vmatmul.bf16.gmra.mxu0 %v856
    %v938 = vpop.f32.mrf.mxu0
    %v939 = vadd.f32 0.0, %v938
    %v940 = vpop.f32.mrf.mxu0
    %v941 = vadd.f32 0.0, %v940
    %942 = vmatmul.bf16.gmra.mxu0 %v857
    %v943 = vpop.f32.mrf.mxu0
    %v944 = vadd.f32 0.0, %v943
    %v945 = vpop.f32.mrf.mxu0
    %v946 = vadd.f32 0.0, %v945
    %947 = vmatmul.bf16.gmra.mxu0 %v858
    %v948 = vpop.f32.mrf.mxu0
    %v949 = vadd.f32 0.0, %v948
    %v950 = vpop.f32.mrf.mxu0
    %v951 = vadd.f32 0.0, %v950
    %952 = vdwg.mxu0
    %v969 = vunpack.c.l.b16 %v839
    %v970 = vunpack.c.l.b16 %v840
    %v971 = vunpack.c.l.b16 %v841
    %v972 = vunpack.c.l.b16 %v842
    %v973 = vunpack.c.l.b16 %v843
    %v974 = vunpack.c.l.b16 %v844
    %v975 = vunpack.c.l.b16 %v845
    %v976 = vunpack.c.l.b16 %v846
    %v977 = vunpack.c.l.b16 %v847
    %v978 = vunpack.c.l.b16 %v848
    %v979 = vunpack.c.l.b16 %v849
    %v980 = vunpack.c.l.b16 %v850
    %v981 = vunpack.c.l.b16 %v851
    %v982 = vunpack.c.l.b16 %v852
    %v983 = vunpack.c.l.b16 %v853
    %v984 = vunpack.c.l.b16 %v854
    %v985 = vpack.c.b16 %v970, %v969
    %v986 = vpack.c.b16 %v972, %v971
    %v987 = vpack.c.b16 %v974, %v973
    %v988 = vpack.c.b16 %v976, %v975
    %v989 = vpack.c.b16 %v978, %v977
    %v990 = vpack.c.b16 %v980, %v979
    %v991 = vpack.c.b16 %v982, %v981
    %v992 = vpack.c.b16 %v984, %v983
    %1001 = vmatpush.bf16.msra.mxu0 %v992
    %1002 = vmatpush.bf16.msra.mxu0 %v991
    %1003 = vmatpush.bf16.msra.mxu0 %v990
    %1004 = vmatpush.bf16.msra.mxu0 %v989
    %1005 = vmatpush.bf16.msra.mxu0 %v988
    %1006 = vmatpush.bf16.msra.mxu0 %v987
    %1007 = vmatpush.bf16.msra.mxu0 %v986
    %1008 = vmatpush.bf16.msra.mxu0 %v985
    %1009 = vmatmul.bf16.gmra.mxu0 %v686
    %v1010 = vpop.f32.mrf.mxu0
    %v1011 = vadd.f32 %v934, %v1010
    %v1012 = vpop.f32.mrf.mxu0
    %v1013 = vadd.f32 %v936, %v1012
    %1014 = vmatmul.bf16.gmra.mxu0 %v687
    %v1015 = vpop.f32.mrf.mxu0
    %v1016 = vadd.f32 %v939, %v1015
    %v1017 = vpop.f32.mrf.mxu0
    %v1018 = vadd.f32 %v941, %v1017
    %1019 = vmatmul.bf16.gmra.mxu0 %v688
    %v1020 = vpop.f32.mrf.mxu0
    %v1021 = vadd.f32 %v944, %v1020
    %v1022 = vpop.f32.mrf.mxu0
    %v1023 = vadd.f32 %v946, %v1022
    %1024 = vmatmul.bf16.gmra.mxu0 %v689
    %v1025 = vpop.f32.mrf.mxu0
    %v1026 = vadd.f32 %v949, %v1025
    %v1027 = vpop.f32.mrf.mxu0
    %v1028 = vadd.f32 %v951, %v1027
    %1029 = vdwg.mxu0
    %s1030 = scalar_lea.vmem %s7, 1
    %v1031 = vld [vmem:[%s1030] sm:$0x1]
    %v1033 = vperm.slane %v1031, 0
    %v1035 = vadd.f32 %v1011, %v1033
    %v1036 = vadd.f32 %v1013, %v1033
    %v1037 = vadd.f32 %v1016, %v1033
    %v1038 = vadd.f32 %v1018, %v1033
    %v1039 = vadd.f32 %v1021, %v1033
    %v1040 = vadd.f32 %v1023, %v1033
    %v1041 = vadd.f32 %v1026, %v1033
    %v1042 = vadd.f32 %v1028, %v1033
    %v1043 = vmax.f32 %v1035, 0.0
    %v1044 = vmax.f32 %v1036, 0.0
    %v1045 = vmax.f32 %v1037, 0.0
    %v1046 = vmax.f32 %v1038, 0.0
    %v1047 = vmax.f32 %v1039, 0.0
    %v1048 = vmax.f32 %v1040, 0.0
    %v1049 = vmax.f32 %v1041, 0.0
    %v1050 = vmax.f32 %v1042, 0.0
    %v1051 = vmul.f32 %v1043, %v1043
    %v1052 = vmul.f32 %v1044, %v1044
    %v1053 = vmul.f32 %v1045, %v1045
    %v1054 = vmul.f32 %v1046, %v1046
    %v1055 = vmul.f32 %v1047, %v1047
    %v1056 = vmul.f32 %v1048, %v1048
    %v1057 = vmul.f32 %v1049, %v1049
    %v1058 = vmul.f32 %v1050, %v1050
    %1059 = vadd.xlane.f32.xlu0 %v1051
    %v1060 = vpop.xlane.xlu0 %1059
    %1061 = vadd.xlane.f32.xlu0 %v1052
    %v1062 = vpop.xlane.xlu0 %1061
    %1063 = vadd.xlane.f32.xlu0 %v1053
    %v1064 = vpop.xlane.xlu0 %1063
    %1065 = vadd.xlane.f32.xlu0 %v1054
    %v1066 = vpop.xlane.xlu0 %1065
    %1067 = vadd.xlane.f32.xlu0 %v1055
    %v1068 = vpop.xlane.xlu0 %1067
    %1069 = vadd.xlane.f32.xlu0 %v1056
    %v1070 = vpop.xlane.xlu0 %1069
    %1071 = vadd.xlane.f32.xlu0 %v1057
    %v1072 = vpop.xlane.xlu0 %1071
    %1073 = vadd.xlane.f32.xlu0 %v1058
    %v1074 = vpop.xlane.xlu0 %1073
    %v1075 = vmax.f32 %v1060, 1e-24
    %v1076 = vmax.f32 %v1062, 1e-24
    %v1077 = vmax.f32 %v1064, 1e-24
    %v1078 = vmax.f32 %v1066, 1e-24
    %v1079 = vmax.f32 %v1068, 1e-24
    %v1080 = vmax.f32 %v1070, 1e-24
    %v1081 = vmax.f32 %v1072, 1e-24
    %v1082 = vmax.f32 %v1074, 1e-24
    %v1083 = vrsqrt.pop %v1075
    %v1084 = vmul.f32 %v1083, %v1075
    %v1085 = vmul.f32 %v1084, %v1083
    %v1086 = vmul.f32 0.5, %v1085
    %v1087 = vsub.f32 1.5, %v1086
    %v1088 = vmul.f32 %v1083, %v1087
    %vm1089 = vweird.f32 %v1075
    %vm1090 = vweird.f32 %v1083
    %vm1091 = vmor %vm1089, %vm1090
    %v1092 = vsel %vm1091, %v1083, %v1088
    %v1093 = vrsqrt.pop %v1076
    %v1094 = vmul.f32 %v1093, %v1076
    %v1095 = vmul.f32 %v1094, %v1093
    %v1096 = vmul.f32 0.5, %v1095
    %v1097 = vsub.f32 1.5, %v1096
    %v1098 = vmul.f32 %v1093, %v1097
    %vm1099 = vweird.f32 %v1076
    %vm1100 = vweird.f32 %v1093
    %vm1101 = vmor %vm1099, %vm1100
    %v1102 = vsel %vm1101, %v1093, %v1098
    %v1103 = vrsqrt.pop %v1077
    %v1104 = vmul.f32 %v1103, %v1077
    %v1105 = vmul.f32 %v1104, %v1103
    %v1106 = vmul.f32 0.5, %v1105
    %v1107 = vsub.f32 1.5, %v1106
    %v1108 = vmul.f32 %v1103, %v1107
    %vm1109 = vweird.f32 %v1077
    %vm1110 = vweird.f32 %v1103
    %vm1111 = vmor %vm1109, %vm1110
    %v1112 = vsel %vm1111, %v1103, %v1108
    %v1113 = vrsqrt.pop %v1078
    %v1114 = vmul.f32 %v1113, %v1078
    %v1115 = vmul.f32 %v1114, %v1113
    %v1116 = vmul.f32 0.5, %v1115
    %v1117 = vsub.f32 1.5, %v1116
    %v1118 = vmul.f32 %v1113, %v1117
    %vm1119 = vweird.f32 %v1078
    %vm1120 = vweird.f32 %v1113
    %vm1121 = vmor %vm1119, %vm1120
    %v1122 = vsel %vm1121, %v1113, %v1118
    %v1123 = vrsqrt.pop %v1079
    %v1124 = vmul.f32 %v1123, %v1079
    %v1125 = vmul.f32 %v1124, %v1123
    %v1126 = vmul.f32 0.5, %v1125
    %v1127 = vsub.f32 1.5, %v1126
    %v1128 = vmul.f32 %v1123, %v1127
    %vm1129 = vweird.f32 %v1079
    %vm1130 = vweird.f32 %v1123
    %vm1131 = vmor %vm1129, %vm1130
    %v1132 = vsel %vm1131, %v1123, %v1128
    %v1133 = vrsqrt.pop %v1080
    %v1134 = vmul.f32 %v1133, %v1080
    %v1135 = vmul.f32 %v1134, %v1133
    %v1136 = vmul.f32 0.5, %v1135
    %v1137 = vsub.f32 1.5, %v1136
    %v1138 = vmul.f32 %v1133, %v1137
    %vm1139 = vweird.f32 %v1080
    %vm1140 = vweird.f32 %v1133
    %vm1141 = vmor %vm1139, %vm1140
    %v1142 = vsel %vm1141, %v1133, %v1138
    %v1143 = vrsqrt.pop %v1081
    %v1144 = vmul.f32 %v1143, %v1081
    %v1145 = vmul.f32 %v1144, %v1143
    %v1146 = vmul.f32 0.5, %v1145
    %v1147 = vsub.f32 1.5, %v1146
    %v1148 = vmul.f32 %v1143, %v1147
    %vm1149 = vweird.f32 %v1081
    %vm1150 = vweird.f32 %v1143
    %vm1151 = vmor %vm1149, %vm1150
    %v1152 = vsel %vm1151, %v1143, %v1148
    %v1153 = vrsqrt.pop %v1082
    %v1154 = vmul.f32 %v1153, %v1082
    %v1155 = vmul.f32 %v1154, %v1153
    %v1156 = vmul.f32 0.5, %v1155
    %v1157 = vsub.f32 1.5, %v1156
    %v1158 = vmul.f32 %v1153, %v1157
    %vm1159 = vweird.f32 %v1082
    %vm1160 = vweird.f32 %v1153
    %vm1161 = vmor %vm1159, %vm1160
    %v1162 = vsel %vm1161, %v1153, %v1158
    %v1163 = vmul.f32 %v1043, %v1092
    %v1164 = vmul.f32 %v1044, %v1102
    %v1165 = vmul.f32 %v1045, %v1112
    %v1166 = vmul.f32 %v1046, %v1122
    %v1167 = vmul.f32 %v1047, %v1132
    %v1168 = vmul.f32 %v1048, %v1142
    %v1169 = vmul.f32 %v1049, %v1152
    %v1170 = vmul.f32 %v1050, %v1162
    %v1171 = vpack.c.bf16 %v1164, %v1163
    %v1172 = vpack.c.bf16 %v1166, %v1165
    %v1173 = vpack.c.bf16 %v1168, %v1167
    %v1174 = vpack.c.bf16 %v1170, %v1169
    %s1175 = scalar_lea.vmem [#allocation5], 128
    %v1176 = vld [vmem:[%s1175] sm:$0xf]
    %v1177 = vld [vmem:[%s1175 + $0x4] sm:$0xf]
    %v1178 = vld [vmem:[%s1175 + $0x8] sm:$0xf]
    %v1179 = vld [vmem:[%s1175 + $0xc] sm:$0xf]
    %v1180 = vld [vmem:[%s1175 + $0x10] sm:$0xf]
    %v1181 = vld [vmem:[%s1175 + $0x14] sm:$0xf]
    %v1182 = vld [vmem:[%s1175 + $0x18] sm:$0xf]
    %v1183 = vld [vmem:[%s1175 + $0x1c] sm:$0xf]
    %v1184 = vld [vmem:[%s1175 + $0x20] sm:$0xf]
    %v1185 = vld [vmem:[%s1175 + $0x24] sm:$0xf]
    %v1186 = vld [vmem:[%s1175 + $0x28] sm:$0xf]
    %v1187 = vld [vmem:[%s1175 + $0x2c] sm:$0xf]
    %v1188 = vld [vmem:[%s1175 + $0x30] sm:$0xf]
    %v1189 = vld [vmem:[%s1175 + $0x34] sm:$0xf]
    %v1190 = vld [vmem:[%s1175 + $0x38] sm:$0xf]
    %v1191 = vld [vmem:[%s1175 + $0x3c] sm:$0xf]
    %s1192 = scalar_lea.vmem [#allocation7], 2
    %v1193 = vld [vmem:[%s1192] sm:$0x1]
    %v1195 = vperm.slane %v1193, 0
    %v1213 = vunpack.c.l.b16 %v1176
    %v1214 = vunpack.c.l.b16 %v1177
    %v1215 = vunpack.c.l.b16 %v1178
    %v1216 = vunpack.c.l.b16 %v1179
    %v1217 = vunpack.c.l.b16 %v1180
    %v1218 = vunpack.c.l.b16 %v1181
    %v1219 = vunpack.c.l.b16 %v1182
    %v1220 = vunpack.c.l.b16 %v1183
    %v1221 = vunpack.c.l.b16 %v1184
    %v1222 = vunpack.c.l.b16 %v1185
    %v1223 = vunpack.c.l.b16 %v1186
    %v1224 = vunpack.c.l.b16 %v1187
    %v1225 = vunpack.c.l.b16 %v1188
    %v1226 = vunpack.c.l.b16 %v1189
    %v1227 = vunpack.c.l.b16 %v1190
    %v1228 = vunpack.c.l.b16 %v1191
    %v1229 = vpack.c.b16 %v1214, %v1213
    %v1230 = vpack.c.b16 %v1216, %v1215
    %v1231 = vpack.c.b16 %v1218, %v1217
    %v1232 = vpack.c.b16 %v1220, %v1219
    %v1233 = vpack.c.b16 %v1222, %v1221
    %v1234 = vpack.c.b16 %v1224, %v1223
    %v1235 = vpack.c.b16 %v1226, %v1225
    %v1236 = vpack.c.b16 %v1228, %v1227
    %1245 = vmatpush.bf16.msra.mxu0 %v1236
    %1246 = vmatpush.bf16.msra.mxu0 %v1235
    %1247 = vmatpush.bf16.msra.mxu0 %v1234
    %1248 = vmatpush.bf16.msra.mxu0 %v1233
    %1249 = vmatpush.bf16.msra.mxu0 %v1232
    %1250 = vmatpush.bf16.msra.mxu0 %v1231
    %1251 = vmatpush.bf16.msra.mxu0 %v1230
    %1252 = vmatpush.bf16.msra.mxu0 %v1229
    %1253 = vmatmul.bf16.gmra.mxu0 %v1171
    %v1254 = vpop.f32.mrf.mxu0
    %v1255 = vadd.f32 %v1195, %v1254
    %v1256 = vpop.f32.mrf.mxu0
    %v1257 = vadd.f32 %v1195, %v1256
    %1258 = vmatmul.bf16.gmra.mxu0 %v1172
    %v1259 = vpop.f32.mrf.mxu0
    %v1260 = vadd.f32 %v1195, %v1259
    %v1261 = vpop.f32.mrf.mxu0
    %v1262 = vadd.f32 %v1195, %v1261
    %1263 = vmatmul.bf16.gmra.mxu0 %v1173
    %v1264 = vpop.f32.mrf.mxu0
    %v1265 = vadd.f32 %v1195, %v1264
    %v1266 = vpop.f32.mrf.mxu0
    %v1267 = vadd.f32 %v1195, %v1266
    %1268 = vmatmul.bf16.gmra.mxu0 %v1174
    %v1269 = vpop.f32.mrf.mxu0
    %v1270 = vadd.f32 %v1195, %v1269
    %v1271 = vpop.f32.mrf.mxu0
    %v1272 = vadd.f32 %v1195, %v1271
    %1273 = vdwg.mxu0
    %v1274 = vpack.c.bf16 %v1257, %v1255
    %v1275 = vpack.c.bf16 %v1262, %v1260
    %v1276 = vpack.c.bf16 %v1267, %v1265
    %v1277 = vpack.c.bf16 %v1272, %v1270
    %1278 = vmatpush.bf16.msra.mxu0 0
    %1279 = vmatpush.bf16.msra.mxu0 0
    %1280 = vmatpush.bf16.msra.mxu0 0
    %1281 = vmatpush.bf16.msra.mxu0 0
    %1282 = vmatpush.bf16.msra.mxu0 %v1277
    %1283 = vmatpush.bf16.msra.mxu0 %v1276
    %1284 = vmatpush.bf16.msra.mxu0 %v1275
    %1285 = vmatpush.bf16.msra.mxu0 %v1274
    %1286 = vmatmul.bf16.gmra.mxu0 %v260
    %v1287 = vpop.f32.mrf.mxu0
    %v1288 = vadd.f32 0.0, %v1287
    %v1289 = vpop.f32.mrf.mxu0
    %v1290 = vadd.f32 0.0, %v1289
    %1291 = vmatmul.bf16.gmra.mxu0 %v263
    %v1292 = vpop.f32.mrf.mxu0
    %v1293 = vadd.f32 0.0, %v1292
    %v1294 = vpop.f32.mrf.mxu0
    %v1295 = vadd.f32 0.0, %v1294
    %1296 = vmatmul.bf16.gmra.mxu0 %v266
    %v1297 = vpop.f32.mrf.mxu0
    %v1298 = vadd.f32 0.0, %v1297
    %v1299 = vpop.f32.mrf.mxu0
    %v1300 = vadd.f32 0.0, %v1299
    %1301 = vmatmul.bf16.gmra.mxu0 %v269
    %v1302 = vpop.f32.mrf.mxu0
    %v1303 = vadd.f32 0.0, %v1302
    %v1304 = vpop.f32.mrf.mxu0
    %v1305 = vadd.f32 0.0, %v1304
    %1306 = vdwg.mxu0
    %v1307 = vadd.f32 %v1163, %v1288
    %v1308 = vadd.f32 %v1164, %v1290
    %v1309 = vadd.f32 %v1165, %v1293
    %v1310 = vadd.f32 %v1166, %v1295
    %v1311 = vadd.f32 %v1167, %v1298
    %v1312 = vadd.f32 %v1168, %v1300
    %v1313 = vadd.f32 %v1169, %v1303
    %v1314 = vadd.f32 %v1170, %v1305
    %v1315 = vmul.f32 %v1307, %v311
    %v1316 = vmul.f32 %v1308, %v316
    %v1317 = vmul.f32 %v1309, %v321
    %v1318 = vmul.f32 %v1310, %v326
    %v1319 = vmul.f32 %v1311, %v331
    %v1320 = vmul.f32 %v1312, %v336
    %v1321 = vmul.f32 %v1313, %v341
    %v1322 = vmul.f32 %v1314, %v346
    %s1323 = scalar_lea.vmem [#allocation8], 128
    %v1324 = vld [vmem:[%s1323] sm:$0xf]
    %v1325 = vld [vmem:[%s1323 + $0x4] sm:$0xf]
    %v1326 = vld [vmem:[%s1323 + $0x8] sm:$0xf]
    %v1327 = vld [vmem:[%s1323 + $0xc] sm:$0xf]
    %v1328 = vld [vmem:[%s1323 + $0x10] sm:$0xf]
    %v1329 = vld [vmem:[%s1323 + $0x14] sm:$0xf]
    %v1330 = vld [vmem:[%s1323 + $0x18] sm:$0xf]
    %v1331 = vld [vmem:[%s1323 + $0x1c] sm:$0xf]
    %v1332 = vld [vmem:[%s1323 + $0x20] sm:$0xf]
    %v1333 = vld [vmem:[%s1323 + $0x24] sm:$0xf]
    %v1334 = vld [vmem:[%s1323 + $0x28] sm:$0xf]
    %v1335 = vld [vmem:[%s1323 + $0x2c] sm:$0xf]
    %v1336 = vld [vmem:[%s1323 + $0x30] sm:$0xf]
    %v1337 = vld [vmem:[%s1323 + $0x34] sm:$0xf]
    %v1338 = vld [vmem:[%s1323 + $0x38] sm:$0xf]
    %v1339 = vld [vmem:[%s1323 + $0x3c] sm:$0xf]
    %v1340 = vpack.c.bf16 %v1316, %v1315
    %v1341 = vpack.c.bf16 %v1318, %v1317
    %v1342 = vpack.c.bf16 %v1320, %v1319
    %v1343 = vpack.c.bf16 %v1322, %v1321
    %s1344 = scalar_lea.vmem [#allocation10], 128
    %v1345 = vld [vmem:[%s1344] sm:$0xf]
    %v1346 = vld [vmem:[%s1344 + $0x4] sm:$0xf]
    %v1347 = vld [vmem:[%s1344 + $0x8] sm:$0xf]
    %v1348 = vld [vmem:[%s1344 + $0xc] sm:$0xf]
    %v1349 = vld [vmem:[%s1344 + $0x10] sm:$0xf]
    %v1350 = vld [vmem:[%s1344 + $0x14] sm:$0xf]
    %v1351 = vld [vmem:[%s1344 + $0x18] sm:$0xf]
    %v1352 = vld [vmem:[%s1344 + $0x1c] sm:$0xf]
    %v1353 = vld [vmem:[%s1344 + $0x20] sm:$0xf]
    %v1354 = vld [vmem:[%s1344 + $0x24] sm:$0xf]
    %v1355 = vld [vmem:[%s1344 + $0x28] sm:$0xf]
    %v1356 = vld [vmem:[%s1344 + $0x2c] sm:$0xf]
    %v1357 = vld [vmem:[%s1344 + $0x30] sm:$0xf]
    %v1358 = vld [vmem:[%s1344 + $0x34] sm:$0xf]
    %v1359 = vld [vmem:[%s1344 + $0x38] sm:$0xf]
    %v1360 = vld [vmem:[%s1344 + $0x3c] sm:$0xf]
    %v1377 = vunpack.c.l.b16 %v1345
    %v1378 = vunpack.c.l.b16 %v1346
    %v1379 = vunpack.c.l.b16 %v1347
    %v1380 = vunpack.c.l.b16 %v1348
    %v1381 = vunpack.c.l.b16 %v1349
    %v1382 = vunpack.c.l.b16 %v1350
    %v1383 = vunpack.c.l.b16 %v1351
    %v1384 = vunpack.c.l.b16 %v1352
    %v1385 = vunpack.c.l.b16 %v1353
    %v1386 = vunpack.c.l.b16 %v1354
    %v1387 = vunpack.c.l.b16 %v1355
    %v1388 = vunpack.c.l.b16 %v1356
    %v1389 = vunpack.c.l.b16 %v1357
    %v1390 = vunpack.c.l.b16 %v1358
    %v1391 = vunpack.c.l.b16 %v1359
    %v1392 = vunpack.c.l.b16 %v1360
    %v1393 = vpack.c.b16 %v1378, %v1377
    %v1394 = vpack.c.b16 %v1380, %v1379
    %v1395 = vpack.c.b16 %v1382, %v1381
    %v1396 = vpack.c.b16 %v1384, %v1383
    %v1397 = vpack.c.b16 %v1386, %v1385
    %v1398 = vpack.c.b16 %v1388, %v1387
    %v1399 = vpack.c.b16 %v1390, %v1389
    %v1400 = vpack.c.b16 %v1392, %v1391
    %1409 = vmatpush.bf16.msra.mxu0 %v1400
    %1410 = vmatpush.bf16.msra.mxu0 %v1399
    %1411 = vmatpush.bf16.msra.mxu0 %v1398
    %1412 = vmatpush.bf16.msra.mxu0 %v1397
    %1413 = vmatpush.bf16.msra.mxu0 %v1396
    %1414 = vmatpush.bf16.msra.mxu0 %v1395
    %1415 = vmatpush.bf16.msra.mxu0 %v1394
    %1416 = vmatpush.bf16.msra.mxu0 %v1393
    %1417 = vmatmul.bf16.gmra.mxu0 %v1340
    %v1418 = vpop.f32.mrf.mxu0
    %v1419 = vadd.f32 0.0, %v1418
    %v1420 = vpop.f32.mrf.mxu0
    %v1421 = vadd.f32 0.0, %v1420
    %1422 = vmatmul.bf16.gmra.mxu0 %v1341
    %v1423 = vpop.f32.mrf.mxu0
    %v1424 = vadd.f32 0.0, %v1423
    %v1425 = vpop.f32.mrf.mxu0
    %v1426 = vadd.f32 0.0, %v1425
    %1427 = vmatmul.bf16.gmra.mxu0 %v1342
    %v1428 = vpop.f32.mrf.mxu0
    %v1429 = vadd.f32 0.0, %v1428
    %v1430 = vpop.f32.mrf.mxu0
    %v1431 = vadd.f32 0.0, %v1430
    %1432 = vmatmul.bf16.gmra.mxu0 %v1343
    %v1433 = vpop.f32.mrf.mxu0
    %v1434 = vadd.f32 0.0, %v1433
    %v1435 = vpop.f32.mrf.mxu0
    %v1436 = vadd.f32 0.0, %v1435
    %1437 = vdwg.mxu0
    %v1454 = vunpack.c.l.b16 %v1324
    %v1455 = vunpack.c.l.b16 %v1325
    %v1456 = vunpack.c.l.b16 %v1326
    %v1457 = vunpack.c.l.b16 %v1327
    %v1458 = vunpack.c.l.b16 %v1328
    %v1459 = vunpack.c.l.b16 %v1329
    %v1460 = vunpack.c.l.b16 %v1330
    %v1461 = vunpack.c.l.b16 %v1331
    %v1462 = vunpack.c.l.b16 %v1332
    %v1463 = vunpack.c.l.b16 %v1333
    %v1464 = vunpack.c.l.b16 %v1334
    %v1465 = vunpack.c.l.b16 %v1335
    %v1466 = vunpack.c.l.b16 %v1336
    %v1467 = vunpack.c.l.b16 %v1337
    %v1468 = vunpack.c.l.b16 %v1338
    %v1469 = vunpack.c.l.b16 %v1339
    %v1470 = vpack.c.b16 %v1455, %v1454
    %v1471 = vpack.c.b16 %v1457, %v1456
    %v1472 = vpack.c.b16 %v1459, %v1458
    %v1473 = vpack.c.b16 %v1461, %v1460
    %v1474 = vpack.c.b16 %v1463, %v1462
    %v1475 = vpack.c.b16 %v1465, %v1464
    %v1476 = vpack.c.b16 %v1467, %v1466
    %v1477 = vpack.c.b16 %v1469, %v1468
    %1486 = vmatpush.bf16.msra.mxu0 %v1477
    %1487 = vmatpush.bf16.msra.mxu0 %v1476
    %1488 = vmatpush.bf16.msra.mxu0 %v1475
    %1489 = vmatpush.bf16.msra.mxu0 %v1474
    %1490 = vmatpush.bf16.msra.mxu0 %v1473
    %1491 = vmatpush.bf16.msra.mxu0 %v1472
    %1492 = vmatpush.bf16.msra.mxu0 %v1471
    %1493 = vmatpush.bf16.msra.mxu0 %v1470
    %1494 = vmatmul.bf16.gmra.mxu0 %v1171
    %v1495 = vpop.f32.mrf.mxu0
    %v1496 = vadd.f32 %v1419, %v1495
    %v1497 = vpop.f32.mrf.mxu0
    %v1498 = vadd.f32 %v1421, %v1497
    %1499 = vmatmul.bf16.gmra.mxu0 %v1172
    %v1500 = vpop.f32.mrf.mxu0
    %v1501 = vadd.f32 %v1424, %v1500
    %v1502 = vpop.f32.mrf.mxu0
    %v1503 = vadd.f32 %v1426, %v1502
    %1504 = vmatmul.bf16.gmra.mxu0 %v1173
    %v1505 = vpop.f32.mrf.mxu0
    %v1506 = vadd.f32 %v1429, %v1505
    %v1507 = vpop.f32.mrf.mxu0
    %v1508 = vadd.f32 %v1431, %v1507
    %1509 = vmatmul.bf16.gmra.mxu0 %v1174
    %v1510 = vpop.f32.mrf.mxu0
    %v1511 = vadd.f32 %v1434, %v1510
    %v1512 = vpop.f32.mrf.mxu0
    %v1513 = vadd.f32 %v1436, %v1512
    %1514 = vdwg.mxu0
    %s1515 = scalar_lea.vmem %s7, 2
    %v1516 = vld [vmem:[%s1515] sm:$0x1]
    %v1518 = vperm.slane %v1516, 0
    %v1520 = vadd.f32 %v1496, %v1518
    %v1521 = vadd.f32 %v1498, %v1518
    %v1522 = vadd.f32 %v1501, %v1518
    %v1523 = vadd.f32 %v1503, %v1518
    %v1524 = vadd.f32 %v1506, %v1518
    %v1525 = vadd.f32 %v1508, %v1518
    %v1526 = vadd.f32 %v1511, %v1518
    %v1527 = vadd.f32 %v1513, %v1518
    %1528 = vst [vmem:[#allocation11] sm:$0xff] %v1520
    %1529 = vst [vmem:[#allocation11 + $0x8] sm:$0xff] %v1521
    %1530 = vst [vmem:[#allocation11 + $0x10] sm:$0xff] %v1522
    %1531 = vst [vmem:[#allocation11 + $0x18] sm:$0xff] %v1523
    %1532 = vst [vmem:[#allocation11 + $0x20] sm:$0xff] %v1524
    %1533 = vst [vmem:[#allocation11 + $0x28] sm:$0xff] %v1525
    %1534 = vst [vmem:[#allocation11 + $0x30] sm:$0xff] %v1526
    %1535 = vst [vmem:[#allocation11 + $0x38] sm:$0xff] %v1527
    // Predicated region
    $region54: #{tpu_custom_call.1} parent=1 // pred_check
      _
    $region55: #{tpu_custom_call.1} parent=1 // pred_check_branch
      %1537 = sbr.rel (0) target = $region57
    $region56: #{tpu_custom_call.1} parent=1 // pred_region
      %1539 = vsyncadd [#allocation4], 0
      %s1540 = sshll.u32 [#allocation11], 4
      %s1541 = int_to_ptr.vmem [resolvable:$true] %s1540
      %s1542 = sshll.u32 %s8, 4
      %s1543 = int_to_ptr.hbm [resolvable:$true] %s1542
      %1548 = dma.vmem_to_hbm [thread:$0]  %s1541, 1024, %s1543, [#allocation4], 128, 128, 8
    $region57: #{tpu_custom_call.1} parent=1 // pred_fallthru
      _
    // Predicated region
    $region58: #{tpu_custom_call.1} parent=1 // pred_check
      _
    $region59: #{tpu_custom_call.1} parent=1 // pred_check_branch
      %1550 = sbr.rel (0) target = $region61
    $region60: #{tpu_custom_call.1} parent=1 // pred_region
      %1552 = dma.done [#allocation4], 1024
    $region61: #{tpu_custom_call.1} parent=1 // pred_fallthru
      _
    %1553 = vsyncpa [#allocation3], 1
    %1554 = vsyncpa [#allocation6], 1
    %1555 = vsyncpa [#allocation9], 1
    %1556 = vsyncpa [#allocation4], 1

</llo_original>
